<compile_context>
chip_gen: v6e
topology: v6e:2x2x1
jax: 0.10.0
libtpu: 0.0.40
codegen_flags: <defaults>
</compile_context>

<pallas_src>
import functools

import jax
import jax.numpy as jnp
from jax import lax
from jax.experimental import pallas as pl
from jax.experimental.pallas import tpu as pltpu


# ----------------------------------------------------------------------------
# Pallas kernel
# ----------------------------------------------------------------------------
def _layernorm(h, g, b, eps):
    mu = jnp.mean(h, axis=-1, keepdims=True)
    var = jnp.mean((h - mu) ** 2, axis=-1, keepdims=True)
    return (h - mu) * lax.rsqrt(var + eps) * g + b


def transformer_block_kernel(
    x_ref,
    ln1_g_ref, ln1_b_ref, ln2_g_ref, ln2_b_ref,
    wqkv_ref, bqkv_ref, wo_ref, bo_ref,
    wp_ref, bp_ref, wout_ref, bout_ref,
    o_ref,
    *, batch_block, seq_len, num_heads, head_dim, kv_width, eps,
):
    x = x_ref[...].astype(jnp.float32)               # (M, D), M = batch_block*seq_len
    M, D = x.shape

    # ---- LN1 + fused, lane-padded QKV projection (one lane-dense MXU pass) ---
    h = _layernorm(x, ln1_g_ref[...], ln1_b_ref[...], eps).astype(jnp.bfloat16)
    qkv = jnp.dot(h, wqkv_ref[...], preferred_element_type=jnp.float32) + bqkv_ref[...]

    scale = head_dim ** -0.5
    q = (qkv[:, :D] * scale).astype(jnp.bfloat16)                        # (M, D)
    k = qkv[:, D:D + head_dim].astype(jnp.bfloat16)                      # (M, hd)
    v = qkv[:, D + kv_width:D + kv_width + head_dim].astype(jnp.bfloat16)

    k3 = k.reshape(batch_block, seq_len, head_dim)   # K/V shared across heads (MQA)
    v3 = v.reshape(batch_block, seq_len, head_dim)

    # ---- MQA: batch dim rides the MXU batch dimension; each head's output is
    # folded directly into the W_O projection (lane-dense f32 accumulator). ----
    attn_acc = jnp.zeros((M, D), jnp.float32)
    for hi in range(num_heads):                      # small static loop (heads only)
        c0 = hi * head_dim
        q_h = q[:, c0:c0 + head_dim].reshape(batch_block, seq_len, head_dim)
        sc = lax.dot_general(                        # (b, S, S), contract hd, batch b
            q_h, k3, (((2,), (2,)), ((0,), (0,))),
            preferred_element_type=jnp.float32)
        sc = sc - jnp.max(sc, axis=-1, keepdims=True)
        p = jnp.exp(sc)
        p = p * pl.reciprocal(jnp.sum(p, axis=-1, keepdims=True), approx=True)
        av = lax.dot_general(                        # (b, S, hd)
            p.astype(jnp.bfloat16), v3, (((2,), (1,)), ((0,), (0,))),
            preferred_element_type=jnp.float32)
        av = av.reshape(M, head_dim).astype(jnp.bfloat16)
        attn_acc = attn_acc + jnp.dot(
            av, wo_ref[c0:c0 + head_dim, :], preferred_element_type=jnp.float32)

    x = x + attn_acc + bo_ref[...]                   # residual in f32

    # ---- LN2 + GEGLU feed-forward (split up-projection; hp never built) ------
    h2 = _layernorm(x, ln2_g_ref[...], ln2_b_ref[...], eps).astype(jnp.bfloat16)
    hidden = wout_ref.shape[0]
    xp = jnp.dot(h2, wp_ref[:, :hidden],
                 preferred_element_type=jnp.float32) + bp_ref[:, :hidden]
    gate = jnp.dot(h2, wp_ref[:, hidden:],
                   preferred_element_type=jnp.float32) + bp_ref[:, hidden:]
    # exact GELU (matches PyTorch F.gelu default): 0.5*x*(1+erf(x/sqrt(2)))
    gelu = 0.5 * xp * (1.0 + lax.erf(xp * (2.0 ** -0.5)))
    ff = (gelu * gate).astype(jnp.bfloat16)
    ff = jnp.dot(ff, wout_ref[...], preferred_element_type=jnp.float32) + bout_ref[...]

    o_ref[...] = (x + ff).astype(o_ref.dtype)


# ----------------------------------------------------------------------------
# Wrapper (pallas_call plumbing)
# ----------------------------------------------------------------------------
def run_transformer_block(x, p, *, num_heads, eps, row_target=1024):
    B, S, D = x.shape
    assert D % num_heads == 0
    head_dim = D // num_heads
    hidden = p["w_out"].shape[0]
    kv_width = ((head_dim + 127) // 128) * 128       # 128-lane aligned K/V segments

    # Largest divisor of B keeping the row tile <= row_target while leaving the
    # grid with >= 2 steps (keeps both v7x TensorCores busy, enables pipelining).
    min_grid = 2 if B >= 2 else 1
    batch_block = 1
    for d in range(1, B + 1):
        if B % d == 0 and d * S <= row_target and B // d >= min_grid:
            batch_block = d
    m_blk = batch_block * S
    grid = (B // batch_block,)

    x2 = x.reshape(B * S, D)                         # lane-dense row-major slab

    def pad_cols(w, width):
        extra = width - w.shape[1]
        return w if extra == 0 else jnp.pad(w, ((0, 0), (0, extra)))

    # fused QKV with lane-padded K/V column blocks (zeros in the pad lanes)
    w_qkv = jnp.concatenate(
        [p["w_q"], pad_cols(p["w_k"], kv_width), pad_cols(p["w_v"], kv_width)], axis=1)
    b_qkv = jnp.concatenate(
        [p["b_q"], pad_cols(p["b_k"], kv_width), pad_cols(p["b_v"], kv_width)], axis=1)

    weights = [
        p["ln1_g"], p["ln1_b"], p["ln2_g"], p["ln2_b"],
        w_qkv, b_qkv, p["w_o"], p["b_o"],
        p["w_p"], p["b_p"], p["w_out"], p["b_out"],
    ]
    in_specs = [pl.BlockSpec((m_blk, D), lambda i: (i, 0))]
    # grid-invariant weights: constant index_map -> DMA'd once, never re-fetched
    in_specs += [pl.BlockSpec(w.shape, lambda i: (0, 0)) for w in weights]

    flops = int(2 * B * S * D * (D + 2 * kv_width)        # fused QKV
                + 4 * B * num_heads * S * S * head_dim    # scores + probs@v
                + 2 * B * S * D * D                       # out proj
                + 2 * B * S * D * (2 * hidden)            # FFN up-proj
                + 2 * B * S * hidden * D)                 # FFN out
    transcendentals = int(B * num_heads * S * S + B * S * hidden)
    weight_bytes = sum(int(w.size) * w.dtype.itemsize for w in weights)
    bytes_accessed = int(2 * x2.size * x2.dtype.itemsize + weight_bytes)

    # Real VMEM footprint (double-buffered IO tiles + weights + f32 intermediates),
    # capped at 48 MiB so it fits v7x's 64 MiB physical VMEM with headroom.
    io_vmem = 2 * 2 * m_blk * D * x2.dtype.itemsize
    w_vmem = 2 * weight_bytes
    interm_vmem = 8 * m_blk * 4 * (D + 2 * kv_width + 2 * hidden + 4 * D)
    vmem_limit_bytes = min(48 << 20, max(32 << 20, io_vmem + w_vmem + interm_vmem))

    kernel = functools.partial(
        transformer_block_kernel,
        batch_block=batch_block, seq_len=S, num_heads=num_heads,
        head_dim=head_dim, kv_width=kv_width, eps=eps,
    )
    out = pl.pallas_call(
        kernel,
        out_shape=jax.ShapeDtypeStruct((B * S, D), x.dtype),
        grid=grid,
        in_specs=in_specs,
        out_specs=pl.BlockSpec((m_blk, D), lambda i: (i, 0)),
        compiler_params=pltpu.CompilerParams(
            dimension_semantics=("parallel",),
            vmem_limit_bytes=vmem_limit_bytes,
        ),
        cost_estimate=pl.CostEstimate(
            flops=flops, transcendentals=transcendentals,
            bytes_accessed=bytes_accessed),
    )(x2, *weights)
    return out.reshape(B, S, D)


# ----------------------------------------------------------------------------
# Deterministic parameter init (bf16 weights, f32 biases / LN params)
# ----------------------------------------------------------------------------
def init_params(key, embd_dim, num_heads, mlp_ratio):
    D = embd_dim
    hd = D // num_heads
    hidden = int(D * mlp_ratio)

    def nrm(k, shape, scale=0.02):
        return jax.random.normal(k, shape, dtype=jnp.float32) * scale

    ks = iter(jax.random.split(key, 20))
    return {
        "ln1_g": 1.0 + nrm(next(ks), (1, D)),
        "ln1_b": nrm(next(ks), (1, D)),
        "ln2_g": 1.0 + nrm(next(ks), (1, D)),
        "ln2_b": nrm(next(ks), (1, D)),
        "w_q": nrm(next(ks), (D, D)).astype(jnp.bfloat16),
        "b_q": nrm(next(ks), (1, D)),
        "w_k": nrm(next(ks), (D, hd)).astype(jnp.bfloat16),
        "b_k": nrm(next(ks), (1, hd)),
        "w_v": nrm(next(ks), (D, hd)).astype(jnp.bfloat16),
        "b_v": nrm(next(ks), (1, hd)),
        "w_o": nrm(next(ks), (D, D)).astype(jnp.bfloat16),
        "b_o": nrm(next(ks), (1, D)),
        "w_p": nrm(next(ks), (D, 2 * hidden)).astype(jnp.bfloat16),
        "b_p": nrm(next(ks), (1, 2 * hidden)),
        "w_out": nrm(next(ks), (hidden, D)).astype(jnp.bfloat16),
        "b_out": nrm(next(ks), (1, D)),
    }


# ----------------------------------------------------------------------------
# Pure-JAX reference (f32 math on the same bf16 weights) for correctness check
# ----------------------------------------------------------------------------
def _ref_ln(h, g, b, eps):
    mu = h.mean(-1, keepdims=True)
    var = ((h - mu) ** 2).mean(-1, keepdims=True)
    return (h - mu) / jnp.sqrt(var + eps) * g + b


def ref_transformer_block(x, p, *, num_heads, eps):
    B, S, D = x.shape
    hd = D // num_heads
    xf = x.astype(jnp.float32)
    wq = p["w_q"].astype(jnp.float32)
    wk = p["w_k"].astype(jnp.float32)
    wv = p["w_v"].astype(jnp.float32)
    wo = p["w_o"].astype(jnp.float32)
    wp = p["w_p"].astype(jnp.float32)
    wout = p["w_out"].astype(jnp.float32)

    h = _ref_ln(xf, p["ln1_g"][0], p["ln1_b"][0], eps)
    q = h @ wq + p["b_q"][0]
    k = h @ wk + p["b_k"][0]
    v = h @ wv + p["b_v"][0]
    q = q.reshape(B, S, num_heads, hd).transpose(0, 2, 1, 3)
    scores = jnp.einsum("bhsd,btd->bhst", q, k) * hd ** -0.5
    probs = jax.nn.softmax(scores, axis=-1)
    attn = jnp.einsum("bhst,btd->bhsd", probs, v)
    attn = attn.transpose(0, 2, 1, 3).reshape(B, S, D)
    xf = xf + attn @ wo + p["b_o"][0]

    h2 = _ref_ln(xf, p["ln2_g"][0], p["ln2_b"][0], eps)
    hp = h2 @ wp + p["b_p"][0]
    hidden = wout.shape[0]
    ff = jax.nn.gelu(hp[..., :hidden], approximate=False) * hp[..., hidden:]
    return (xf + ff @ wout + p["b_out"][0]).astype(x.dtype)


# ----------------------------------------------------------------------------
if __name__ == "__main__":
    cfg = dict(embd_dim=128, num_heads=4, mlp_ratio=4.0, layer_norm_eps=1e-5)
    B, S = 2, 8

    key = jax.random.PRNGKey(0)
    k_par, k_x = jax.random.split(key)
    params = init_params(k_par, cfg["embd_dim"], cfg["num_heads"], cfg["mlp_ratio"])
    x = jax.random.normal(k_x, (B, S, cfg["embd_dim"]), dtype=jnp.float32)
    x = x.astype(jnp.bfloat16)

    out = run_transformer_block(
        x, params, num_heads=cfg["num_heads"], eps=cfg["layer_norm_eps"])
    out = jax.block_until_ready(out)
    assert out.shape == (B, S, cfg["embd_dim"]), out.shape

    ref = jax.block_until_ready(
        ref_transformer_block(x, params, num_heads=cfg["num_heads"],
                              eps=cfg["layer_norm_eps"]))
    out32 = out.astype(jnp.float32)
    ref32 = ref.astype(jnp.float32)
    max_err = float(jnp.max(jnp.abs(out32 - ref32)))
    assert jnp.allclose(out32, ref32, rtol=3e-2, atol=3e-2), max_err

    print("KERNEL_OK")
</pallas_src>

<mosaic_0001>
module attributes {stable_mosaic.version = 11 : i64} {
  func.func @transformer_block_kernel(%arg0: i32, %arg1: memref<8x128xbf16, #tpu.memory_space<vmem>>, %arg2: memref<1x128xf32, #tpu.memory_space<vmem>>, %arg3: memref<1x128xf32, #tpu.memory_space<vmem>>, %arg4: memref<1x128xf32, #tpu.memory_space<vmem>>, %arg5: memref<1x128xf32, #tpu.memory_space<vmem>>, %arg6: memref<128x384xbf16, #tpu.memory_space<vmem>>, %arg7: memref<1x384xf32, #tpu.memory_space<vmem>>, %arg8: memref<128x128xbf16, #tpu.memory_space<vmem>>, %arg9: memref<1x128xf32, #tpu.memory_space<vmem>>, %arg10: memref<128x1024xbf16, #tpu.memory_space<vmem>>, %arg11: memref<1x1024xf32, #tpu.memory_space<vmem>>, %arg12: memref<512x128xbf16, #tpu.memory_space<vmem>>, %arg13: memref<1x128xf32, #tpu.memory_space<vmem>>, %arg14: memref<8x128xbf16, #tpu.memory_space<vmem>>) attributes {dimension_semantics = [#tpu.dimension_semantics<parallel>], iteration_bounds = array<i64: 2>, scalar_prefetch = 0 : i64, scratch_operands = 0 : i64, tpu.core_type = #tpu.core_type<tc>, window_params = [{transform_indices = @transform_0, window_bounds = array<i64: 8, 128>}, {pipeline_mode = #tpu.pipeline_mode<synchronous>, transform_indices = @transform_1, window_bounds = array<i64: 1, 128>}, {pipeline_mode = #tpu.pipeline_mode<synchronous>, transform_indices = @transform_2, window_bounds = array<i64: 1, 128>}, {pipeline_mode = #tpu.pipeline_mode<synchronous>, transform_indices = @transform_3, window_bounds = array<i64: 1, 128>}, {pipeline_mode = #tpu.pipeline_mode<synchronous>, transform_indices = @transform_4, window_bounds = array<i64: 1, 128>}, {pipeline_mode = #tpu.pipeline_mode<synchronous>, transform_indices = @transform_5, window_bounds = array<i64: 128, 384>}, {pipeline_mode = #tpu.pipeline_mode<synchronous>, transform_indices = @transform_6, window_bounds = array<i64: 1, 384>}, {pipeline_mode = #tpu.pipeline_mode<synchronous>, transform_indices = @transform_7, window_bounds = array<i64: 128, 128>}, {pipeline_mode = #tpu.pipeline_mode<synchronous>, transform_indices = @transform_8, window_bounds = array<i64: 1, 128>}, {pipeline_mode = #tpu.pipeline_mode<synchronous>, transform_indices = @transform_9, window_bounds = array<i64: 128, 1024>}, {pipeline_mode = #tpu.pipeline_mode<synchronous>, transform_indices = @transform_10, window_bounds = array<i64: 1, 1024>}, {pipeline_mode = #tpu.pipeline_mode<synchronous>, transform_indices = @transform_11, window_bounds = array<i64: 512, 128>}, {pipeline_mode = #tpu.pipeline_mode<synchronous>, transform_indices = @transform_12, window_bounds = array<i64: 1, 128>}, {transform_indices = @transform_13, window_bounds = array<i64: 8, 128>}]} {
    %c0 = arith.constant 0 : index
    %c0_0 = arith.constant 0 : index
    %0 = vector.load %arg1[%c0, %c0_0] : memref<8x128xbf16, #tpu.memory_space<vmem>>, vector<8x128xbf16>
    %1 = arith.extf %0 : vector<8x128xbf16> to vector<8x128xf32>
    %c0_1 = arith.constant 0 : index
    %c0_2 = arith.constant 0 : index
    %2 = vector.load %arg2[%c0_1, %c0_2] : memref<1x128xf32, #tpu.memory_space<vmem>>, vector<1x128xf32>
    %c0_3 = arith.constant 0 : index
    %c0_4 = arith.constant 0 : index
    %3 = vector.load %arg3[%c0_3, %c0_4] : memref<1x128xf32, #tpu.memory_space<vmem>>, vector<1x128xf32>
    %cst = arith.constant dense<0.000000e+00> : vector<8xf32>
    %4 = vector.multi_reduction <add>, %1, %cst [1] : vector<8x128xf32> to vector<8xf32>
    %5 = vector.shape_cast %4 : vector<8xf32> to vector<8x1xf32>
    %cst_5 = arith.constant 1.280000e+02 : f32
    %6 = vector.broadcast %cst_5 : f32 to vector<8x1xf32>
    %7 = arith.divf %5, %6 : vector<8x1xf32>
    %8 = vector.broadcast %7 : vector<8x1xf32> to vector<8x128xf32>
    %9 = arith.subf %1, %8 : vector<8x128xf32>
    %10 = arith.mulf %9, %9 : vector<8x128xf32>
    %cst_6 = arith.constant dense<0.000000e+00> : vector<8xf32>
    %11 = vector.multi_reduction <add>, %10, %cst_6 [1] : vector<8x128xf32> to vector<8xf32>
    %12 = vector.shape_cast %11 : vector<8xf32> to vector<8x1xf32>
    %cst_7 = arith.constant 1.280000e+02 : f32
    %13 = vector.broadcast %cst_7 : f32 to vector<8x1xf32>
    %14 = arith.divf %12, %13 : vector<8x1xf32>
    %15 = vector.broadcast %7 : vector<8x1xf32> to vector<8x128xf32>
    %16 = arith.subf %1, %15 : vector<8x128xf32>
    %cst_8 = arith.constant 9.99999974E-6 : f32
    %17 = vector.broadcast %cst_8 : f32 to vector<8x1xf32>
    %18 = arith.addf %14, %17 : vector<8x1xf32>
    %19 = math.rsqrt %18 : vector<8x1xf32>
    %20 = vector.broadcast %19 : vector<8x1xf32> to vector<8x128xf32>
    %21 = arith.mulf %16, %20 : vector<8x128xf32>
    %22 = vector.broadcast %2 : vector<1x128xf32> to vector<8x128xf32>
    %23 = arith.mulf %21, %22 : vector<8x128xf32>
    %24 = vector.broadcast %3 : vector<1x128xf32> to vector<8x128xf32>
    %25 = arith.addf %23, %24 : vector<8x128xf32>
    %26 = arith.truncf %25 : vector<8x128xf32> to vector<8x128xbf16>
    %c0_9 = arith.constant 0 : index
    %c0_10 = arith.constant 0 : index
    %27 = vector.load %arg6[%c0_9, %c0_10] : memref<128x384xbf16, #tpu.memory_space<vmem>>, vector<128x384xbf16>
    %cst_11 = arith.constant dense<0.000000e+00> : vector<8x384xf32>
    %28 = tpu.matmul %26, %27, %cst_11 {dimension_numbers = #tpu.dot_dimension_numbers<[1], [0], [0], [1], [0, 0, 1, 1], [], []>} : vector<8x128xbf16>, vector<128x384xbf16>, vector<8x384xf32> -> vector<8x384xf32>
    %c0_12 = arith.constant 0 : index
    %c0_13 = arith.constant 0 : index
    %29 = vector.load %arg7[%c0_12, %c0_13] : memref<1x384xf32, #tpu.memory_space<vmem>>, vector<1x384xf32>
    %30 = vector.broadcast %29 : vector<1x384xf32> to vector<8x384xf32>
    %31 = arith.addf %28, %30 : vector<8x384xf32>
    %32 = vector.extract_strided_slice %31 {offsets = [0, 0], sizes = [8, 128], strides = [1, 1]} : vector<8x384xf32> to vector<8x128xf32>
    %cst_14 = arith.constant 0.176776692 : f32
    %33 = vector.broadcast %cst_14 : f32 to vector<8x128xf32>
    %34 = arith.mulf %32, %33 : vector<8x128xf32>
    %35 = arith.truncf %34 : vector<8x128xf32> to vector<8x128xbf16>
    %36 = vector.extract_strided_slice %31 {offsets = [0, 128], sizes = [8, 32], strides = [1, 1]} : vector<8x384xf32> to vector<8x32xf32>
    %37 = arith.truncf %36 : vector<8x32xf32> to vector<8x32xbf16>
    %38 = vector.extract_strided_slice %31 {offsets = [0, 256], sizes = [8, 32], strides = [1, 1]} : vector<8x384xf32> to vector<8x32xf32>
    %39 = arith.truncf %38 : vector<8x32xf32> to vector<8x32xbf16>
    %40 = vector.shape_cast %37 : vector<8x32xbf16> to vector<1x8x32xbf16>
    %41 = vector.shape_cast %39 : vector<8x32xbf16> to vector<1x8x32xbf16>
    %cst_15 = arith.constant 0.000000e+00 : f32
    %42 = vector.broadcast %cst_15 : f32 to vector<8x128xf32>
    %43 = vector.extract_strided_slice %35 {offsets = [0, 0], sizes = [8, 32], strides = [1, 1]} : vector<8x128xbf16> to vector<8x32xbf16>
    %44 = vector.shape_cast %43 : vector<8x32xbf16> to vector<1x8x32xbf16>
    %cst_16 = arith.constant dense<0.000000e+00> : vector<1x8x8xf32>
    %45 = tpu.matmul %44, %40, %cst_16 {dimension_numbers = #tpu.dot_dimension_numbers<[2], [2], [1], [1], [0, 0, 0, 1, 1, 1], [0], [0]>} : vector<1x8x32xbf16>, vector<1x8x32xbf16>, vector<1x8x8xf32> -> vector<1x8x8xf32>
    %cst_17 = arith.constant dense<0xFF800000> : vector<1x8xf32>
    %46 = vector.multi_reduction <maximumf>, %45, %cst_17 [2] : vector<1x8x8xf32> to vector<1x8xf32>
    %47 = vector.shape_cast %46 : vector<1x8xf32> to vector<1x8x1xf32>
    %48 = vector.broadcast %47 : vector<1x8x1xf32> to vector<1x8x8xf32>
    %49 = arith.subf %45, %48 : vector<1x8x8xf32>
    %50 = math.exp %49 : vector<1x8x8xf32>
    %cst_18 = arith.constant dense<0.000000e+00> : vector<1x8xf32>
    %51 = vector.multi_reduction <add>, %50, %cst_18 [2] : vector<1x8x8xf32> to vector<1x8xf32>
    %52 = vector.shape_cast %51 : vector<1x8xf32> to vector<1x8x1xf32>
    %53 = tpu.reciprocal %52 {approx = true} : vector<1x8x1xf32> -> vector<1x8x1xf32>
    %54 = vector.broadcast %53 : vector<1x8x1xf32> to vector<1x8x8xf32>
    %55 = arith.mulf %50, %54 : vector<1x8x8xf32>
    %56 = arith.truncf %55 : vector<1x8x8xf32> to vector<1x8x8xbf16>
    %cst_19 = arith.constant dense<0.000000e+00> : vector<1x8x32xf32>
    %57 = tpu.matmul %56, %41, %cst_19 {dimension_numbers = #tpu.dot_dimension_numbers<[2], [1], [1], [2], [0, 0, 0, 1, 1, 2], [0], [0]>} : vector<1x8x8xbf16>, vector<1x8x32xbf16>, vector<1x8x32xf32> -> vector<1x8x32xf32>
    %58 = vector.shape_cast %57 : vector<1x8x32xf32> to vector<8x32xf32>
    %59 = arith.truncf %58 : vector<8x32xf32> to vector<8x32xbf16>
    %c0_20 = arith.constant 0 : index
    %c0_21 = arith.constant 0 : index
    %60 = vector.load %arg8[%c0_20, %c0_21] : memref<128x128xbf16, #tpu.memory_space<vmem>>, vector<32x128xbf16>
    %cst_22 = arith.constant dense<0.000000e+00> : vector<8x128xf32>
    %61 = tpu.matmul %59, %60, %cst_22 {dimension_numbers = #tpu.dot_dimension_numbers<[1], [0], [0], [1], [0, 0, 1, 1], [], []>} : vector<8x32xbf16>, vector<32x128xbf16>, vector<8x128xf32> -> vector<8x128xf32>
    %62 = arith.addf %42, %61 : vector<8x128xf32>
    %63 = vector.extract_strided_slice %35 {offsets = [0, 32], sizes = [8, 32], strides = [1, 1]} : vector<8x128xbf16> to vector<8x32xbf16>
    %64 = vector.shape_cast %63 : vector<8x32xbf16> to vector<1x8x32xbf16>
    %cst_23 = arith.constant dense<0.000000e+00> : vector<1x8x8xf32>
    %65 = tpu.matmul %64, %40, %cst_23 {dimension_numbers = #tpu.dot_dimension_numbers<[2], [2], [1], [1], [0, 0, 0, 1, 1, 1], [0], [0]>} : vector<1x8x32xbf16>, vector<1x8x32xbf16>, vector<1x8x8xf32> -> vector<1x8x8xf32>
    %cst_24 = arith.constant dense<0xFF800000> : vector<1x8xf32>
    %66 = vector.multi_reduction <maximumf>, %65, %cst_24 [2] : vector<1x8x8xf32> to vector<1x8xf32>
    %67 = vector.shape_cast %66 : vector<1x8xf32> to vector<1x8x1xf32>
    %68 = vector.broadcast %67 : vector<1x8x1xf32> to vector<1x8x8xf32>
    %69 = arith.subf %65, %68 : vector<1x8x8xf32>
    %70 = math.exp %69 : vector<1x8x8xf32>
    %cst_25 = arith.constant dense<0.000000e+00> : vector<1x8xf32>
    %71 = vector.multi_reduction <add>, %70, %cst_25 [2] : vector<1x8x8xf32> to vector<1x8xf32>
    %72 = vector.shape_cast %71 : vector<1x8xf32> to vector<1x8x1xf32>
    %73 = tpu.reciprocal %72 {approx = true} : vector<1x8x1xf32> -> vector<1x8x1xf32>
    %74 = vector.broadcast %73 : vector<1x8x1xf32> to vector<1x8x8xf32>
    %75 = arith.mulf %70, %74 : vector<1x8x8xf32>
    %76 = arith.truncf %75 : vector<1x8x8xf32> to vector<1x8x8xbf16>
    %cst_26 = arith.constant dense<0.000000e+00> : vector<1x8x32xf32>
    %77 = tpu.matmul %76, %41, %cst_26 {dimension_numbers = #tpu.dot_dimension_numbers<[2], [1], [1], [2], [0, 0, 0, 1, 1, 2], [0], [0]>} : vector<1x8x8xbf16>, vector<1x8x32xbf16>, vector<1x8x32xf32> -> vector<1x8x32xf32>
    %78 = vector.shape_cast %77 : vector<1x8x32xf32> to vector<8x32xf32>
    %79 = arith.truncf %78 : vector<8x32xf32> to vector<8x32xbf16>
    %c32 = arith.constant 32 : index
    %c0_27 = arith.constant 0 : index
    %80 = vector.load %arg8[%c32, %c0_27] : memref<128x128xbf16, #tpu.memory_space<vmem>>, vector<32x128xbf16>
    %cst_28 = arith.constant dense<0.000000e+00> : vector<8x128xf32>
    %81 = tpu.matmul %79, %80, %cst_28 {dimension_numbers = #tpu.dot_dimension_numbers<[1], [0], [0], [1], [0, 0, 1, 1], [], []>} : vector<8x32xbf16>, vector<32x128xbf16>, vector<8x128xf32> -> vector<8x128xf32>
    %82 = arith.addf %62, %81 : vector<8x128xf32>
    %83 = vector.extract_strided_slice %35 {offsets = [0, 64], sizes = [8, 32], strides = [1, 1]} : vector<8x128xbf16> to vector<8x32xbf16>
    %84 = vector.shape_cast %83 : vector<8x32xbf16> to vector<1x8x32xbf16>
    %cst_29 = arith.constant dense<0.000000e+00> : vector<1x8x8xf32>
    %85 = tpu.matmul %84, %40, %cst_29 {dimension_numbers = #tpu.dot_dimension_numbers<[2], [2], [1], [1], [0, 0, 0, 1, 1, 1], [0], [0]>} : vector<1x8x32xbf16>, vector<1x8x32xbf16>, vector<1x8x8xf32> -> vector<1x8x8xf32>
    %cst_30 = arith.constant dense<0xFF800000> : vector<1x8xf32>
    %86 = vector.multi_reduction <maximumf>, %85, %cst_30 [2] : vector<1x8x8xf32> to vector<1x8xf32>
    %87 = vector.shape_cast %86 : vector<1x8xf32> to vector<1x8x1xf32>
    %88 = vector.broadcast %87 : vector<1x8x1xf32> to vector<1x8x8xf32>
    %89 = arith.subf %85, %88 : vector<1x8x8xf32>
    %90 = math.exp %89 : vector<1x8x8xf32>
    %cst_31 = arith.constant dense<0.000000e+00> : vector<1x8xf32>
    %91 = vector.multi_reduction <add>, %90, %cst_31 [2] : vector<1x8x8xf32> to vector<1x8xf32>
    %92 = vector.shape_cast %91 : vector<1x8xf32> to vector<1x8x1xf32>
    %93 = tpu.reciprocal %92 {approx = true} : vector<1x8x1xf32> -> vector<1x8x1xf32>
    %94 = vector.broadcast %93 : vector<1x8x1xf32> to vector<1x8x8xf32>
    %95 = arith.mulf %90, %94 : vector<1x8x8xf32>
    %96 = arith.truncf %95 : vector<1x8x8xf32> to vector<1x8x8xbf16>
    %cst_32 = arith.constant dense<0.000000e+00> : vector<1x8x32xf32>
    %97 = tpu.matmul %96, %41, %cst_32 {dimension_numbers = #tpu.dot_dimension_numbers<[2], [1], [1], [2], [0, 0, 0, 1, 1, 2], [0], [0]>} : vector<1x8x8xbf16>, vector<1x8x32xbf16>, vector<1x8x32xf32> -> vector<1x8x32xf32>
    %98 = vector.shape_cast %97 : vector<1x8x32xf32> to vector<8x32xf32>
    %99 = arith.truncf %98 : vector<8x32xf32> to vector<8x32xbf16>
    %c64 = arith.constant 64 : index
    %c0_33 = arith.constant 0 : index
    %100 = vector.load %arg8[%c64, %c0_33] : memref<128x128xbf16, #tpu.memory_space<vmem>>, vector<32x128xbf16>
    %cst_34 = arith.constant dense<0.000000e+00> : vector<8x128xf32>
    %101 = tpu.matmul %99, %100, %cst_34 {dimension_numbers = #tpu.dot_dimension_numbers<[1], [0], [0], [1], [0, 0, 1, 1], [], []>} : vector<8x32xbf16>, vector<32x128xbf16>, vector<8x128xf32> -> vector<8x128xf32>
    %102 = arith.addf %82, %101 : vector<8x128xf32>
    %103 = vector.extract_strided_slice %35 {offsets = [0, 96], sizes = [8, 32], strides = [1, 1]} : vector<8x128xbf16> to vector<8x32xbf16>
    %104 = vector.shape_cast %103 : vector<8x32xbf16> to vector<1x8x32xbf16>
    %cst_35 = arith.constant dense<0.000000e+00> : vector<1x8x8xf32>
    %105 = tpu.matmul %104, %40, %cst_35 {dimension_numbers = #tpu.dot_dimension_numbers<[2], [2], [1], [1], [0, 0, 0, 1, 1, 1], [0], [0]>} : vector<1x8x32xbf16>, vector<1x8x32xbf16>, vector<1x8x8xf32> -> vector<1x8x8xf32>
    %cst_36 = arith.constant dense<0xFF800000> : vector<1x8xf32>
    %106 = vector.multi_reduction <maximumf>, %105, %cst_36 [2] : vector<1x8x8xf32> to vector<1x8xf32>
    %107 = vector.shape_cast %106 : vector<1x8xf32> to vector<1x8x1xf32>
    %108 = vector.broadcast %107 : vector<1x8x1xf32> to vector<1x8x8xf32>
    %109 = arith.subf %105, %108 : vector<1x8x8xf32>
    %110 = math.exp %109 : vector<1x8x8xf32>
    %cst_37 = arith.constant dense<0.000000e+00> : vector<1x8xf32>
    %111 = vector.multi_reduction <add>, %110, %cst_37 [2] : vector<1x8x8xf32> to vector<1x8xf32>
    %112 = vector.shape_cast %111 : vector<1x8xf32> to vector<1x8x1xf32>
    %113 = tpu.reciprocal %112 {approx = true} : vector<1x8x1xf32> -> vector<1x8x1xf32>
    %114 = vector.broadcast %113 : vector<1x8x1xf32> to vector<1x8x8xf32>
    %115 = arith.mulf %110, %114 : vector<1x8x8xf32>
    %116 = arith.truncf %115 : vector<1x8x8xf32> to vector<1x8x8xbf16>
    %cst_38 = arith.constant dense<0.000000e+00> : vector<1x8x32xf32>
    %117 = tpu.matmul %116, %41, %cst_38 {dimension_numbers = #tpu.dot_dimension_numbers<[2], [1], [1], [2], [0, 0, 0, 1, 1, 2], [0], [0]>} : vector<1x8x8xbf16>, vector<1x8x32xbf16>, vector<1x8x32xf32> -> vector<1x8x32xf32>
    %118 = vector.shape_cast %117 : vector<1x8x32xf32> to vector<8x32xf32>
    %119 = arith.truncf %118 : vector<8x32xf32> to vector<8x32xbf16>
    %c96 = arith.constant 96 : index
    %c0_39 = arith.constant 0 : index
    %120 = vector.load %arg8[%c96, %c0_39] : memref<128x128xbf16, #tpu.memory_space<vmem>>, vector<32x128xbf16>
    %cst_40 = arith.constant dense<0.000000e+00> : vector<8x128xf32>
    %121 = tpu.matmul %119, %120, %cst_40 {dimension_numbers = #tpu.dot_dimension_numbers<[1], [0], [0], [1], [0, 0, 1, 1], [], []>} : vector<8x32xbf16>, vector<32x128xbf16>, vector<8x128xf32> -> vector<8x128xf32>
    %122 = arith.addf %102, %121 : vector<8x128xf32>
    %123 = arith.addf %1, %122 : vector<8x128xf32>
    %c0_41 = arith.constant 0 : index
    %c0_42 = arith.constant 0 : index
    %124 = vector.load %arg9[%c0_41, %c0_42] : memref<1x128xf32, #tpu.memory_space<vmem>>, vector<1x128xf32>
    %125 = vector.broadcast %124 : vector<1x128xf32> to vector<8x128xf32>
    %126 = arith.addf %123, %125 : vector<8x128xf32>
    %c0_43 = arith.constant 0 : index
    %c0_44 = arith.constant 0 : index
    %127 = vector.load %arg4[%c0_43, %c0_44] : memref<1x128xf32, #tpu.memory_space<vmem>>, vector<1x128xf32>
    %c0_45 = arith.constant 0 : index
    %c0_46 = arith.constant 0 : index
    %128 = vector.load %arg5[%c0_45, %c0_46] : memref<1x128xf32, #tpu.memory_space<vmem>>, vector<1x128xf32>
    %cst_47 = arith.constant dense<0.000000e+00> : vector<8xf32>
    %129 = vector.multi_reduction <add>, %126, %cst_47 [1] : vector<8x128xf32> to vector<8xf32>
    %130 = vector.shape_cast %129 : vector<8xf32> to vector<8x1xf32>
    %cst_48 = arith.constant 1.280000e+02 : f32
    %131 = vector.broadcast %cst_48 : f32 to vector<8x1xf32>
    %132 = arith.divf %130, %131 : vector<8x1xf32>
    %133 = vector.broadcast %132 : vector<8x1xf32> to vector<8x128xf32>
    %134 = arith.subf %126, %133 : vector<8x128xf32>
    %135 = arith.mulf %134, %134 : vector<8x128xf32>
    %cst_49 = arith.constant dense<0.000000e+00> : vector<8xf32>
    %136 = vector.multi_reduction <add>, %135, %cst_49 [1] : vector<8x128xf32> to vector<8xf32>
    %137 = vector.shape_cast %136 : vector<8xf32> to vector<8x1xf32>
    %cst_50 = arith.constant 1.280000e+02 : f32
    %138 = vector.broadcast %cst_50 : f32 to vector<8x1xf32>
    %139 = arith.divf %137, %138 : vector<8x1xf32>
    %140 = vector.broadcast %132 : vector<8x1xf32> to vector<8x128xf32>
    %141 = arith.subf %126, %140 : vector<8x128xf32>
    %cst_51 = arith.constant 9.99999974E-6 : f32
    %142 = vector.broadcast %cst_51 : f32 to vector<8x1xf32>
    %143 = arith.addf %139, %142 : vector<8x1xf32>
    %144 = math.rsqrt %143 : vector<8x1xf32>
    %145 = vector.broadcast %144 : vector<8x1xf32> to vector<8x128xf32>
    %146 = arith.mulf %141, %145 : vector<8x128xf32>
    %147 = vector.broadcast %127 : vector<1x128xf32> to vector<8x128xf32>
    %148 = arith.mulf %146, %147 : vector<8x128xf32>
    %149 = vector.broadcast %128 : vector<1x128xf32> to vector<8x128xf32>
    %150 = arith.addf %148, %149 : vector<8x128xf32>
    %151 = arith.truncf %150 : vector<8x128xf32> to vector<8x128xbf16>
    %c0_52 = arith.constant 0 : index
    %c0_53 = arith.constant 0 : index
    %152 = vector.load %arg10[%c0_52, %c0_53] : memref<128x1024xbf16, #tpu.memory_space<vmem>>, vector<128x512xbf16>
    %cst_54 = arith.constant dense<0.000000e+00> : vector<8x512xf32>
    %153 = tpu.matmul %151, %152, %cst_54 {dimension_numbers = #tpu.dot_dimension_numbers<[1], [0], [0], [1], [0, 0, 1, 1], [], []>} : vector<8x128xbf16>, vector<128x512xbf16>, vector<8x512xf32> -> vector<8x512xf32>
    %c0_55 = arith.constant 0 : index
    %c0_56 = arith.constant 0 : index
    %154 = vector.load %arg11[%c0_55, %c0_56] : memref<1x1024xf32, #tpu.memory_space<vmem>>, vector<1x512xf32>
    %155 = vector.broadcast %154 : vector<1x512xf32> to vector<8x512xf32>
    %156 = arith.addf %153, %155 : vector<8x512xf32>
    %c0_57 = arith.constant 0 : index
    %c512 = arith.constant 512 : index
    %157 = vector.load %arg10[%c0_57, %c512] : memref<128x1024xbf16, #tpu.memory_space<vmem>>, vector<128x512xbf16>
    %cst_58 = arith.constant dense<0.000000e+00> : vector<8x512xf32>
    %158 = tpu.matmul %151, %157, %cst_58 {dimension_numbers = #tpu.dot_dimension_numbers<[1], [0], [0], [1], [0, 0, 1, 1], [], []>} : vector<8x128xbf16>, vector<128x512xbf16>, vector<8x512xf32> -> vector<8x512xf32>
    %c0_59 = arith.constant 0 : index
    %c512_60 = arith.constant 512 : index
    %159 = vector.load %arg11[%c0_59, %c512_60] : memref<1x1024xf32, #tpu.memory_space<vmem>>, vector<1x512xf32>
    %160 = vector.broadcast %159 : vector<1x512xf32> to vector<8x512xf32>
    %161 = arith.addf %158, %160 : vector<8x512xf32>
    %cst_61 = arith.constant 5.000000e-01 : f32
    %162 = vector.broadcast %cst_61 : f32 to vector<8x512xf32>
    %163 = arith.mulf %162, %156 : vector<8x512xf32>
    %cst_62 = arith.constant 0.707106769 : f32
    %164 = vector.broadcast %cst_62 : f32 to vector<8x512xf32>
    %165 = arith.mulf %156, %164 : vector<8x512xf32>
    %166 = math.erf %165 : vector<8x512xf32>
    %cst_63 = arith.constant 1.000000e+00 : f32
    %167 = vector.broadcast %cst_63 : f32 to vector<8x512xf32>
    %168 = arith.addf %167, %166 : vector<8x512xf32>
    %169 = arith.mulf %163, %168 : vector<8x512xf32>
    %170 = arith.mulf %169, %161 : vector<8x512xf32>
    %171 = arith.truncf %170 : vector<8x512xf32> to vector<8x512xbf16>
    %c0_64 = arith.constant 0 : index
    %c0_65 = arith.constant 0 : index
    %172 = vector.load %arg12[%c0_64, %c0_65] : memref<512x128xbf16, #tpu.memory_space<vmem>>, vector<512x128xbf16>
    %cst_66 = arith.constant dense<0.000000e+00> : vector<8x128xf32>
    %173 = tpu.matmul %171, %172, %cst_66 {dimension_numbers = #tpu.dot_dimension_numbers<[1], [0], [0], [1], [0, 0, 1, 1], [], []>} : vector<8x512xbf16>, vector<512x128xbf16>, vector<8x128xf32> -> vector<8x128xf32>
    %c0_67 = arith.constant 0 : index
    %c0_68 = arith.constant 0 : index
    %174 = vector.load %arg13[%c0_67, %c0_68] : memref<1x128xf32, #tpu.memory_space<vmem>>, vector<1x128xf32>
    %175 = vector.broadcast %174 : vector<1x128xf32> to vector<8x128xf32>
    %176 = arith.addf %173, %175 : vector<8x128xf32>
    %177 = arith.addf %126, %176 : vector<8x128xf32>
    %178 = arith.truncf %177 : vector<8x128xf32> to vector<8x128xbf16>
    %c0_69 = arith.constant 0 : index
    %c0_70 = arith.constant 0 : index
    %179 = vector.load %arg14[%c0_69, %c0_70] : memref<8x128xbf16, #tpu.memory_space<vmem>>, vector<8x128xbf16>
    tpu.vector_store %arg14[%c0_69, %c0_70], %178 {strides = array<i32>} : memref<8x128xbf16, #tpu.memory_space<vmem>>, vector<8x128xbf16>,
    return
  }
  func.func @transform_0(%arg0: i32) -> (i32, i32) {
    %c0_i32 = arith.constant 0 : i32
    %c0_i32_0 = arith.constant 0 : i32
    return %arg0, %c0_i32 : i32, i32
  }
  func.func @transform_1(%arg0: i32) -> (i32, i32) {
    %c0_i32 = arith.constant 0 : i32
    %c0_i32_0 = arith.constant 0 : i32
    %c0_i32_1 = arith.constant 0 : i32
    return %c0_i32, %c0_i32_0 : i32, i32
  }
  func.func @transform_2(%arg0: i32) -> (i32, i32) {
    %c0_i32 = arith.constant 0 : i32
    %c0_i32_0 = arith.constant 0 : i32
    %c0_i32_1 = arith.constant 0 : i32
    return %c0_i32, %c0_i32_0 : i32, i32
  }
  func.func @transform_3(%arg0: i32) -> (i32, i32) {
    %c0_i32 = arith.constant 0 : i32
    %c0_i32_0 = arith.constant 0 : i32
    %c0_i32_1 = arith.constant 0 : i32
    return %c0_i32, %c0_i32_0 : i32, i32
  }
  func.func @transform_4(%arg0: i32) -> (i32, i32) {
    %c0_i32 = arith.constant 0 : i32
    %c0_i32_0 = arith.constant 0 : i32
    %c0_i32_1 = arith.constant 0 : i32
    return %c0_i32, %c0_i32_0 : i32, i32
  }
  func.func @transform_5(%arg0: i32) -> (i32, i32) {
    %c0_i32 = arith.constant 0 : i32
    %c0_i32_0 = arith.constant 0 : i32
    %c0_i32_1 = arith.constant 0 : i32
    return %c0_i32, %c0_i32_0 : i32, i32
  }
  func.func @transform_6(%arg0: i32) -> (i32, i32) {
    %c0_i32 = arith.constant 0 : i32
    %c0_i32_0 = arith.constant 0 : i32
    %c0_i32_1 = arith.constant 0 : i32
    return %c0_i32, %c0_i32_0 : i32, i32
  }
  func.func @transform_7(%arg0: i32) -> (i32, i32) {
    %c0_i32 = arith.constant 0 : i32
    %c0_i32_0 = arith.constant 0 : i32
    %c0_i32_1 = arith.constant 0 : i32
    return %c0_i32, %c0_i32_0 : i32, i32
  }
  func.func @transform_8(%arg0: i32) -> (i32, i32) {
    %c0_i32 = arith.constant 0 : i32
    %c0_i32_0 = arith.constant 0 : i32
    %c0_i32_1 = arith.constant 0 : i32
    return %c0_i32, %c0_i32_0 : i32, i32
  }
  func.func @transform_9(%arg0: i32) -> (i32, i32) {
    %c0_i32 = arith.constant 0 : i32
    %c0_i32_0 = arith.constant 0 : i32
    %c0_i32_1 = arith.constant 0 : i32
    return %c0_i32, %c0_i32_0 : i32, i32
  }
  func.func @transform_10(%arg0: i32) -> (i32, i32) {
    %c0_i32 = arith.constant 0 : i32
    %c0_i32_0 = arith.constant 0 : i32
    %c0_i32_1 = arith.constant 0 : i32
    return %c0_i32, %c0_i32_0 : i32, i32
  }
  func.func @transform_11(%arg0: i32) -> (i32, i32) {
    %c0_i32 = arith.constant 0 : i32
    %c0_i32_0 = arith.constant 0 : i32
    %c0_i32_1 = arith.constant 0 : i32
    return %c0_i32, %c0_i32_0 : i32, i32
  }
  func.func @transform_12(%arg0: i32) -> (i32, i32) {
    %c0_i32 = arith.constant 0 : i32
    %c0_i32_0 = arith.constant 0 : i32
    %c0_i32_1 = arith.constant 0 : i32
    return %c0_i32, %c0_i32_0 : i32, i32
  }
  func.func @transform_13(%arg0: i32) -> (i32, i32) {
    %c0_i32 = arith.constant 0 : i32
    %c0_i32_0 = arith.constant 0 : i32
    return %arg0, %c0_i32 : i32, i32
  }
}

</mosaic_0001>

<llo_original>
// kernel: tpu_custom_call.1
$region0: #{tpu_custom_call.1}
  #allocation0 [shape = 'u32[]', space=smem, size = 0x4, offset = 0x4, fixed_abs, tag = 'smem constant byte address 0x4 - core index']
  #allocation1 [shape = 'u32[144,128]{1,0:T(1,128)}', space=vmem, size = 0x12000, scoped, tag = 'internal scratch']
  %s0 = inlined_call_operand.hbm [shape: bf16[16,128], index: 0, kind: input, shape index: {}]
  %s1 = inlined_call_operand.vmem [shape: f32[1,128], index: 1, kind: input, shape index: {}]
  %s2 = inlined_call_operand.vmem [shape: f32[1,128], index: 2, kind: input, shape index: {}]
  %s3 = inlined_call_operand.hbm [shape: f32[1,128], index: 3, kind: input, shape index: {}]
  %s4 = inlined_call_operand.vmem [shape: f32[1,128], index: 4, kind: input, shape index: {}]
  %s5 = inlined_call_operand.hbm [shape: bf16[128,384], index: 5, kind: input, shape index: {}]
  %s6 = inlined_call_operand.vmem [shape: f32[1,384], index: 6, kind: input, shape index: {}]
  %s7 = inlined_call_operand.hbm [shape: bf16[128,128], index: 7, kind: input, shape index: {}]
  %s8 = inlined_call_operand.vmem [shape: f32[1,128], index: 8, kind: input, shape index: {}]
  %s9 = inlined_call_operand.hbm [shape: bf16[128,1024], index: 9, kind: input, shape index: {}]
  %s10 = inlined_call_operand.vmem [shape: f32[1,1024], index: 10, kind: input, shape index: {}]
  %s11 = inlined_call_operand.hbm [shape: bf16[512,128], index: 11, kind: input, shape index: {}]
  %s12 = inlined_call_operand.vmem [shape: f32[1,128], index: 12, kind: input, shape index: {}]
  %s13 = inlined_call_operand.hbm [shape: bf16[16,128], index: 13, kind: output, shape index: {}]
  %s14 = sld [smem:[#allocation0]]
  $region109: #{tpu_custom_call.1} parent=0
    _
  %s16 = ssub.s32 1, %s14
  %s17 = scalar_select 0, %s16, %s14
  $region1: #{tpu_custom_call.1} parent=0
    #allocation2 [shape = 'u8[4096]{0}', space=vmem, size = 0x1000, scoped, tag = 'input window, operand 0']
    #allocation3 [shape = 's32[2]{0}', space=sflag, size = 0x8, scoped, tag = 'scoped memory for tpu_custom_call.1']
    #allocation4 [shape = 's32[2]{0}', space=sflag, size = 0x8, scoped, tag = 'scoped memory for tpu_custom_call.1']
    #allocation5 [shape = 'u8[512]{0}', space=vmem, size = 0x400, scoped, tag = 'input window, operand 3, single buffered']
    #allocation6 [shape = 's32[1]{0}', space=sflag, size = 0x4, scoped, tag = 'scoped memory for tpu_custom_call.1']
    #allocation7 [shape = 'u8[98304]{0}', space=vmem, size = 0x18000, scoped, tag = 'input window, operand 5, single buffered']
    #allocation8 [shape = 'u8[32768]{0}', space=vmem, size = 0x8000, scoped, tag = 'input window, operand 7, single buffered']
    #allocation9 [shape = 's32[1]{0}', space=sflag, size = 0x4, scoped, tag = 'scoped memory for tpu_custom_call.1']
    #allocation10 [shape = 'u8[262144]{0}', space=vmem, size = 0x40000, scoped, tag = 'input window, operand 9, single buffered']
    #allocation11 [shape = 'u8[131072]{0}', space=vmem, size = 0x20000, scoped, tag = 'input window, operand 11, single buffered']
    #allocation12 [shape = 's32[1]{0}', space=sflag, size = 0x4, scoped, tag = 'scoped memory for tpu_custom_call.1']
    #allocation13 [shape = 'u8[4096]{0}', space=vmem, size = 0x1000, scoped, tag = 'output window, operand 0']
    %18 = vsyncpa [#allocation3], 0
    %s19 = scalar_lea.sflag [#allocation3], 1
    %20 = vsyncpa %s19, 0
    %21 = vsyncpa [#allocation6], 0
    %22 = vsyncpa [#allocation9], 0
    %23 = vsyncpa [#allocation12], 0
    %24 = vsyncpa [#allocation4], 0
    %s25 = scalar_lea.sflag [#allocation4], 1
    %26 = vsyncpa %s25, 0
    loop: start=0, step=1, limit=4
    $region2: #{tpu_custom_call.1} parent=1 // loop_pre_header
      _
    $region3: #{tpu_custom_call.1} parent=1 // loop_header
      %s28 = sphi 0, %s32
      %p29 = scmp.ge.s32.totalorder %s28, 4
      %s38 = sphi 0, %s40
      %s41 = sphi 0, %s38
      %s42 = sphi 0, %s41
      %s58 = sphi 0, %s42
      %s62 = sphi 0, %s62
      %s64 = sphi 0, %s62
      %s65 = sphi 0, %s64
      %s79 = sphi 0, %s65
      %s83 = sphi 0, %s83
      %s85 = sphi 0, %s83
      %s86 = sphi 0, %s85
      %s100 = sphi 0, %s86
      %s104 = sphi 0, %s104
      %s106 = sphi 0, %s104
      %s107 = sphi 0, %s106
      %s121 = sphi 0, %s107
      %s125 = sphi 0, %s125
      %s127 = sphi 0, %s125
      %s128 = sphi 0, %s127
      %s142 = sphi 0, %s128
      %s146 = sphi 0, %s146
      %s148 = sphi 0, %s146
      %s149 = sphi 0, %s148
      %s163 = sphi 0, %s149
      %s167 = sphi 0, %s167
      %s169 = sphi 0, %s167
      %s170 = sphi 0, %s169
      %s184 = sphi 0, %s170
      %s188 = sphi 0, %s188
      %s190 = sphi 0, %s188
      %s191 = sphi 0, %s190
      %s205 = sphi 0, %s191
      %s209 = sphi 0, %s209
      %s211 = sphi 0, %s209
      %s212 = sphi 0, %s211
      %s226 = sphi 0, %s212
      %s230 = sphi 0, %s230
      %s232 = sphi 0, %s230
      %s233 = sphi 0, %s232
      %s247 = sphi 0, %s233
      %s251 = sphi 0, %s251
      %s253 = sphi 0, %s251
      %s254 = sphi 0, %s253
      %s268 = sphi 0, %s254
      %s272 = sphi 0, %s272
      %s274 = sphi 0, %s272
      %s275 = sphi 0, %s274
      %s289 = sphi 0, %s275
      %s293 = sphi 0, %s293
      %s295 = sphi 0, %s293
      %s296 = sphi 0, %s295
      %s310 = sphi 0, %s296
      %s316 = sphi 0, %s318
      %s319 = sphi 0, %s316
      %s320 = sphi 0, %s319
      %s336 = sphi 0, %s320
    $region4: #{tpu_custom_call.1} parent=1 // loop_header_branch
      %31 = sbr.rel (%p29) target = $region8
    $region5: #{tpu_custom_call.1} parent=1 // loop_body
      %s33 = ssub.s32 %s28, 1
      %s34 = ssub.s32 %s28, 2
      %s35 = sadd.s32 %s28, 1
      %s36 = ssub.s32 %s28, %s35
      %p37 = scmp.eq.s32.totalorder %s36, 0
      %s39 = sadd.s32 %s38, 1
      %s40 = scalar_select %p37, %s38, %s39
      %p43 = pneg %p37
      %p44 = scmp.eq.s32.totalorder %s28, 1
      %p45 = por %p43, %p44
      %p46 = scmp.ne.s32.totalorder %s38, %s41
      %p47 = scmp.eq.s32.totalorder %s28, 0
      %p48 = por %p46, %p47
      %p49 = scmp.ne.s32.totalorder %s38, %s41
      %p50 = scmp.eq.s32.totalorder %s33, 1
      %p51 = por %p49, %p50
      %p52 = scmp.ne.s32.totalorder %s41, %s42
      %p53 = scmp.eq.s32.totalorder %s33, 0
      %p54 = por %p52, %p53
      %p55 = scmp.ne.s32.totalorder %s41, %s42
      %p56 = scmp.eq.s32.totalorder %s34, 1
      %p57 = por %p55, %p56
      %p59 = scmp.ne.s32.totalorder %s42, %s58
      %p60 = scmp.eq.s32.totalorder %s34, 0
      %p61 = por %p59, %p60
      %s63 = sadd.s32 %s62, 1
      %p66 = scmp.eq.s32.totalorder %s28, 1
      %p67 = scmp.ne.s32.totalorder %s62, %s64
      %p68 = scmp.eq.s32.totalorder %s28, 0
      %p69 = por %p67, %p68
      %p70 = scmp.ne.s32.totalorder %s62, %s64
      %p71 = scmp.eq.s32.totalorder %s33, 1
      %p72 = por %p70, %p71
      %p73 = scmp.ne.s32.totalorder %s64, %s65
      %p74 = scmp.eq.s32.totalorder %s33, 0
      %p75 = por %p73, %p74
      %p76 = scmp.ne.s32.totalorder %s64, %s65
      %p77 = scmp.eq.s32.totalorder %s34, 1
      %p78 = por %p76, %p77
      %p80 = scmp.ne.s32.totalorder %s65, %s79
      %p81 = scmp.eq.s32.totalorder %s34, 0
      %p82 = por %p80, %p81
      %s84 = sadd.s32 %s83, 1
      %p87 = scmp.eq.s32.totalorder %s28, 1
      %p88 = scmp.ne.s32.totalorder %s83, %s85
      %p89 = scmp.eq.s32.totalorder %s28, 0
      %p90 = por %p88, %p89
      %p91 = scmp.ne.s32.totalorder %s83, %s85
      %p92 = scmp.eq.s32.totalorder %s33, 1
      %p93 = por %p91, %p92
      %p94 = scmp.ne.s32.totalorder %s85, %s86
      %p95 = scmp.eq.s32.totalorder %s33, 0
      %p96 = por %p94, %p95
      %p97 = scmp.ne.s32.totalorder %s85, %s86
      %p98 = scmp.eq.s32.totalorder %s34, 1
      %p99 = por %p97, %p98
      %p101 = scmp.ne.s32.totalorder %s86, %s100
      %p102 = scmp.eq.s32.totalorder %s34, 0
      %p103 = por %p101, %p102
      %s105 = sadd.s32 %s104, 1
      %p108 = scmp.eq.s32.totalorder %s28, 1
      %p109 = scmp.ne.s32.totalorder %s104, %s106
      %p110 = scmp.eq.s32.totalorder %s28, 0
      %p111 = por %p109, %p110
      %p112 = scmp.ne.s32.totalorder %s104, %s106
      %p113 = scmp.eq.s32.totalorder %s33, 1
      %p114 = por %p112, %p113
      %p115 = scmp.ne.s32.totalorder %s106, %s107
      %p116 = scmp.eq.s32.totalorder %s33, 0
      %p117 = por %p115, %p116
      %p118 = scmp.ne.s32.totalorder %s106, %s107
      %p119 = scmp.eq.s32.totalorder %s34, 1
      %p120 = por %p118, %p119
      %p122 = scmp.ne.s32.totalorder %s107, %s121
      %p123 = scmp.eq.s32.totalorder %s34, 0
      %p124 = por %p122, %p123
      %s126 = sadd.s32 %s125, 1
      %p129 = scmp.eq.s32.totalorder %s28, 1
      %p130 = scmp.ne.s32.totalorder %s125, %s127
      %p131 = scmp.eq.s32.totalorder %s28, 0
      %p132 = por %p130, %p131
      %p133 = scmp.ne.s32.totalorder %s125, %s127
      %p134 = scmp.eq.s32.totalorder %s33, 1
      %p135 = por %p133, %p134
      %p136 = scmp.ne.s32.totalorder %s127, %s128
      %p137 = scmp.eq.s32.totalorder %s33, 0
      %p138 = por %p136, %p137
      %p139 = scmp.ne.s32.totalorder %s127, %s128
      %p140 = scmp.eq.s32.totalorder %s34, 1
      %p141 = por %p139, %p140
      %p143 = scmp.ne.s32.totalorder %s128, %s142
      %p144 = scmp.eq.s32.totalorder %s34, 0
      %p145 = por %p143, %p144
      %s147 = sadd.s32 %s146, 1
      %p150 = scmp.eq.s32.totalorder %s28, 1
      %p151 = scmp.ne.s32.totalorder %s146, %s148
      %p152 = scmp.eq.s32.totalorder %s28, 0
      %p153 = por %p151, %p152
      %p154 = scmp.ne.s32.totalorder %s146, %s148
      %p155 = scmp.eq.s32.totalorder %s33, 1
      %p156 = por %p154, %p155
      %p157 = scmp.ne.s32.totalorder %s148, %s149
      %p158 = scmp.eq.s32.totalorder %s33, 0
      %p159 = por %p157, %p158
      %p160 = scmp.ne.s32.totalorder %s148, %s149
      %p161 = scmp.eq.s32.totalorder %s34, 1
      %p162 = por %p160, %p161
      %p164 = scmp.ne.s32.totalorder %s149, %s163
      %p165 = scmp.eq.s32.totalorder %s34, 0
      %p166 = por %p164, %p165
      %s168 = sadd.s32 %s167, 1
      %p171 = scmp.eq.s32.totalorder %s28, 1
      %p172 = scmp.ne.s32.totalorder %s167, %s169
      %p173 = scmp.eq.s32.totalorder %s28, 0
      %p174 = por %p172, %p173
      %p175 = scmp.ne.s32.totalorder %s167, %s169
      %p176 = scmp.eq.s32.totalorder %s33, 1
      %p177 = por %p175, %p176
      %p178 = scmp.ne.s32.totalorder %s169, %s170
      %p179 = scmp.eq.s32.totalorder %s33, 0
      %p180 = por %p178, %p179
      %p181 = scmp.ne.s32.totalorder %s169, %s170
      %p182 = scmp.eq.s32.totalorder %s34, 1
      %p183 = por %p181, %p182
      %p185 = scmp.ne.s32.totalorder %s170, %s184
      %p186 = scmp.eq.s32.totalorder %s34, 0
      %p187 = por %p185, %p186
      %s189 = sadd.s32 %s188, 1
      %p192 = scmp.eq.s32.totalorder %s28, 1
      %p193 = scmp.ne.s32.totalorder %s188, %s190
      %p194 = scmp.eq.s32.totalorder %s28, 0
      %p195 = por %p193, %p194
      %p196 = scmp.ne.s32.totalorder %s188, %s190
      %p197 = scmp.eq.s32.totalorder %s33, 1
      %p198 = por %p196, %p197
      %p199 = scmp.ne.s32.totalorder %s190, %s191
      %p200 = scmp.eq.s32.totalorder %s33, 0
      %p201 = por %p199, %p200
      %p202 = scmp.ne.s32.totalorder %s190, %s191
      %p203 = scmp.eq.s32.totalorder %s34, 1
      %p204 = por %p202, %p203
      %p206 = scmp.ne.s32.totalorder %s191, %s205
      %p207 = scmp.eq.s32.totalorder %s34, 0
      %p208 = por %p206, %p207
      %s210 = sadd.s32 %s209, 1
      %p213 = scmp.eq.s32.totalorder %s28, 1
      %p214 = scmp.ne.s32.totalorder %s209, %s211
      %p215 = scmp.eq.s32.totalorder %s28, 0
      %p216 = por %p214, %p215
      %p217 = scmp.ne.s32.totalorder %s209, %s211
      %p218 = scmp.eq.s32.totalorder %s33, 1
      %p219 = por %p217, %p218
      %p220 = scmp.ne.s32.totalorder %s211, %s212
      %p221 = scmp.eq.s32.totalorder %s33, 0
      %p222 = por %p220, %p221
      %p223 = scmp.ne.s32.totalorder %s211, %s212
      %p224 = scmp.eq.s32.totalorder %s34, 1
      %p225 = por %p223, %p224
      %p227 = scmp.ne.s32.totalorder %s212, %s226
      %p228 = scmp.eq.s32.totalorder %s34, 0
      %p229 = por %p227, %p228
      %s231 = sadd.s32 %s230, 1
      %p234 = scmp.eq.s32.totalorder %s28, 1
      %p235 = scmp.ne.s32.totalorder %s230, %s232
      %p236 = scmp.eq.s32.totalorder %s28, 0
      %p237 = por %p235, %p236
      %p238 = scmp.ne.s32.totalorder %s230, %s232
      %p239 = scmp.eq.s32.totalorder %s33, 1
      %p240 = por %p238, %p239
      %p241 = scmp.ne.s32.totalorder %s232, %s233
      %p242 = scmp.eq.s32.totalorder %s33, 0
      %p243 = por %p241, %p242
      %p244 = scmp.ne.s32.totalorder %s232, %s233
      %p245 = scmp.eq.s32.totalorder %s34, 1
      %p246 = por %p244, %p245
      %p248 = scmp.ne.s32.totalorder %s233, %s247
      %p249 = scmp.eq.s32.totalorder %s34, 0
      %p250 = por %p248, %p249
      %s252 = sadd.s32 %s251, 1
      %p255 = scmp.eq.s32.totalorder %s28, 1
      %p256 = scmp.ne.s32.totalorder %s251, %s253
      %p257 = scmp.eq.s32.totalorder %s28, 0
      %p258 = por %p256, %p257
      %p259 = scmp.ne.s32.totalorder %s251, %s253
      %p260 = scmp.eq.s32.totalorder %s33, 1
      %p261 = por %p259, %p260
      %p262 = scmp.ne.s32.totalorder %s253, %s254
      %p263 = scmp.eq.s32.totalorder %s33, 0
      %p264 = por %p262, %p263
      %p265 = scmp.ne.s32.totalorder %s253, %s254
      %p266 = scmp.eq.s32.totalorder %s34, 1
      %p267 = por %p265, %p266
      %p269 = scmp.ne.s32.totalorder %s254, %s268
      %p270 = scmp.eq.s32.totalorder %s34, 0
      %p271 = por %p269, %p270
      %s273 = sadd.s32 %s272, 1
      %p276 = scmp.eq.s32.totalorder %s28, 1
      %p277 = scmp.ne.s32.totalorder %s272, %s274
      %p278 = scmp.eq.s32.totalorder %s28, 0
      %p279 = por %p277, %p278
      %p280 = scmp.ne.s32.totalorder %s272, %s274
      %p281 = scmp.eq.s32.totalorder %s33, 1
      %p282 = por %p280, %p281
      %p283 = scmp.ne.s32.totalorder %s274, %s275
      %p284 = scmp.eq.s32.totalorder %s33, 0
      %p285 = por %p283, %p284
      %p286 = scmp.ne.s32.totalorder %s274, %s275
      %p287 = scmp.eq.s32.totalorder %s34, 1
      %p288 = por %p286, %p287
      %p290 = scmp.ne.s32.totalorder %s275, %s289
      %p291 = scmp.eq.s32.totalorder %s34, 0
      %p292 = por %p290, %p291
      %s294 = sadd.s32 %s293, 1
      %p297 = scmp.eq.s32.totalorder %s28, 1
      %p298 = scmp.ne.s32.totalorder %s293, %s295
      %p299 = scmp.eq.s32.totalorder %s28, 0
      %p300 = por %p298, %p299
      %p301 = scmp.ne.s32.totalorder %s293, %s295
      %p302 = scmp.eq.s32.totalorder %s33, 1
      %p303 = por %p301, %p302
      %p304 = scmp.ne.s32.totalorder %s295, %s296
      %p305 = scmp.eq.s32.totalorder %s33, 0
      %p306 = por %p304, %p305
      %p307 = scmp.ne.s32.totalorder %s295, %s296
      %p308 = scmp.eq.s32.totalorder %s34, 1
      %p309 = por %p307, %p308
      %p311 = scmp.ne.s32.totalorder %s296, %s310
      %p312 = scmp.eq.s32.totalorder %s34, 0
      %p313 = por %p311, %p312
      %s314 = ssub.s32 %s28, %s35
      %p315 = scmp.eq.s32.totalorder %s314, 0
      %s317 = sadd.s32 %s316, 1
      %s318 = scalar_select %p315, %s316, %s317
      %p321 = pneg %p315
      %p322 = scmp.eq.s32.totalorder %s28, 1
      %p323 = por %p321, %p322
      %p324 = scmp.ne.s32.totalorder %s316, %s319
      %p325 = scmp.eq.s32.totalorder %s28, 0
      %p326 = por %p324, %p325
      %p327 = scmp.ne.s32.totalorder %s316, %s319
      %p328 = scmp.eq.s32.totalorder %s33, 1
      %p329 = por %p327, %p328
      %p330 = scmp.ne.s32.totalorder %s319, %s320
      %p331 = scmp.eq.s32.totalorder %s33, 0
      %p332 = por %p330, %p331
      %p333 = scmp.ne.s32.totalorder %s319, %s320
      %p334 = scmp.eq.s32.totalorder %s34, 1
      %p335 = por %p333, %p334
      %p337 = scmp.ne.s32.totalorder %s320, %s336
      %p338 = scmp.eq.s32.totalorder %s34, 0
      %p339 = por %p337, %p338
      %p340 = scmp.le.s32.totalorder 1, %s28
      %p341 = scmp.lt.s32.totalorder %s28, 3
      %p342 = pnand %p340, %p341
      %p343 = pneg %p342
      // Predicated region
      $region9: #{tpu_custom_call.1} parent=5 // pred_check
        _
      $region10: #{tpu_custom_call.1} parent=5 // pred_check_branch
        %345 = sbr.rel (%p342) target = $region12
      $region11: #{tpu_custom_call.1} parent=5 // pred_region
        %s346 = ssub.s32 %s28, 1
        // Predicated region
        $region13: #{tpu_custom_call.1} parent=11 // pred_check
          %p347 = pneg %p75
        $region14: #{tpu_custom_call.1} parent=11 // pred_check_branch
          %349 = sbr.rel (%p347) target = $region16
        $region15: #{tpu_custom_call.1} parent=11 // pred_region
          _
        $region16: #{tpu_custom_call.1} parent=11 // pred_fallthru
          _
        // Predicated region
        $region17: #{tpu_custom_call.1} parent=11 // pred_check
          %p350 = pneg %p96
        $region18: #{tpu_custom_call.1} parent=11 // pred_check_branch
          %352 = sbr.rel (%p350) target = $region20
        $region19: #{tpu_custom_call.1} parent=11 // pred_region
          _
        $region20: #{tpu_custom_call.1} parent=11 // pred_fallthru
          _
        // Predicated region
        $region21: #{tpu_custom_call.1} parent=11 // pred_check
          %p353 = pneg %p117
        $region22: #{tpu_custom_call.1} parent=11 // pred_check_branch
          %355 = sbr.rel (%p353) target = $region24
        $region23: #{tpu_custom_call.1} parent=11 // pred_region
          %s357 = ssub.s32 16, 16
          %358 = vsyncadd [#allocation6], %s357
          %s360 = sshll.u32 [#allocation5], 4
          %s361 = int_to_ptr.vmem [resolvable:$true] %s360
          %363 = dma.hbm_to_vmem [thread:$0]  %s3, 16, %s361, [#allocation6]
        $region24: #{tpu_custom_call.1} parent=11 // pred_fallthru
          _
        // Predicated region
        $region25: #{tpu_custom_call.1} parent=11 // pred_check
          %p364 = pneg %p138
        $region26: #{tpu_custom_call.1} parent=11 // pred_check_branch
          %366 = sbr.rel (%p364) target = $region28
        $region27: #{tpu_custom_call.1} parent=11 // pred_region
          _
        $region28: #{tpu_custom_call.1} parent=11 // pred_fallthru
          _
        // Predicated region
        $region29: #{tpu_custom_call.1} parent=11 // pred_check
          %p367 = pneg %p159
        $region30: #{tpu_custom_call.1} parent=11 // pred_check_branch
          %369 = sbr.rel (%p367) target = $region32
        $region31: #{tpu_custom_call.1} parent=11 // pred_region
          %s371 = ssub.s32 3072, 3072
          %372 = vsyncadd [#allocation6], %s371
          %s373 = sshll.u32 [#allocation7], 4
          %s374 = int_to_ptr.vmem [resolvable:$true] %s373
          %379 = dma.hbm_to_vmem [thread:$0]  %s5, 3072, %s374, [#allocation6], 192, 192, 12
        $region32: #{tpu_custom_call.1} parent=11 // pred_fallthru
          _
        // Predicated region
        $region33: #{tpu_custom_call.1} parent=11 // pred_check
          %p380 = pneg %p180
        $region34: #{tpu_custom_call.1} parent=11 // pred_check_branch
          %382 = sbr.rel (%p380) target = $region36
        $region35: #{tpu_custom_call.1} parent=11 // pred_region
          _
        $region36: #{tpu_custom_call.1} parent=11 // pred_fallthru
          _
        // Predicated region
        $region37: #{tpu_custom_call.1} parent=11 // pred_check
          %p383 = pneg %p201
        $region38: #{tpu_custom_call.1} parent=11 // pred_check_branch
          %385 = sbr.rel (%p383) target = $region40
        $region39: #{tpu_custom_call.1} parent=11 // pred_region
          %s387 = ssub.s32 1024, 1024
          %388 = vsyncadd [#allocation9], %s387
          %s389 = sshll.u32 [#allocation8], 4
          %s390 = int_to_ptr.vmem [resolvable:$true] %s389
          %395 = dma.hbm_to_vmem [thread:$0]  %s7, 1024, %s390, [#allocation9], 64, 64, 4
        $region40: #{tpu_custom_call.1} parent=11 // pred_fallthru
          _
        // Predicated region
        $region41: #{tpu_custom_call.1} parent=11 // pred_check
          %p396 = pneg %p222
        $region42: #{tpu_custom_call.1} parent=11 // pred_check_branch
          %398 = sbr.rel (%p396) target = $region44
        $region43: #{tpu_custom_call.1} parent=11 // pred_region
          _
        $region44: #{tpu_custom_call.1} parent=11 // pred_fallthru
          _
        // Predicated region
        $region45: #{tpu_custom_call.1} parent=11 // pred_check
          %p399 = pneg %p243
        $region46: #{tpu_custom_call.1} parent=11 // pred_check_branch
          %401 = sbr.rel (%p399) target = $region48
        $region47: #{tpu_custom_call.1} parent=11 // pred_region
          %s403 = ssub.s32 8192, 8192
          %404 = vsyncadd [#allocation9], %s403
          %s405 = sshll.u32 [#allocation10], 4
          %s406 = int_to_ptr.vmem [resolvable:$true] %s405
          %411 = dma.hbm_to_vmem [thread:$0]  %s9, 8192, %s406, [#allocation9], 512, 512, 32
        $region48: #{tpu_custom_call.1} parent=11 // pred_fallthru
          _
        // Predicated region
        $region49: #{tpu_custom_call.1} parent=11 // pred_check
          %p412 = pneg %p264
        $region50: #{tpu_custom_call.1} parent=11 // pred_check_branch
          %414 = sbr.rel (%p412) target = $region52
        $region51: #{tpu_custom_call.1} parent=11 // pred_region
          _
        $region52: #{tpu_custom_call.1} parent=11 // pred_fallthru
          _
        // Predicated region
        $region53: #{tpu_custom_call.1} parent=11 // pred_check
          %p415 = pneg %p285
        $region54: #{tpu_custom_call.1} parent=11 // pred_check_branch
          %417 = sbr.rel (%p415) target = $region56
        $region55: #{tpu_custom_call.1} parent=11 // pred_region
          %s419 = ssub.s32 4096, 4096
          %420 = vsyncadd [#allocation12], %s419
          %s421 = sshll.u32 [#allocation11], 4
          %s422 = int_to_ptr.vmem [resolvable:$true] %s421
          %427 = dma.hbm_to_vmem [thread:$0]  %s11, 4096, %s422, [#allocation12], 64, 64, 4
        $region56: #{tpu_custom_call.1} parent=11 // pred_fallthru
          _
        // Predicated region
        $region57: #{tpu_custom_call.1} parent=11 // pred_check
          %p428 = pneg %p306
        $region58: #{tpu_custom_call.1} parent=11 // pred_check_branch
          %430 = sbr.rel (%p428) target = $region60
        $region59: #{tpu_custom_call.1} parent=11 // pred_region
          _
        $region60: #{tpu_custom_call.1} parent=11 // pred_fallthru
          _
      $region12: #{tpu_custom_call.1} parent=5 // pred_fallthru
        _
      %p431 = scmp.lt.s32.totalorder %s28, 2
      // Predicated region
      $region61: #{tpu_custom_call.1} parent=5 // pred_check
        %p432 = pneg %p431
      $region62: #{tpu_custom_call.1} parent=5 // pred_check_branch
        %434 = sbr.rel (%p432) target = $region64
      $region63: #{tpu_custom_call.1} parent=5 // pred_region
        // Predicated region
        $region65: #{tpu_custom_call.1} parent=63 // pred_check
          %p435 = pneg %p48
        $region66: #{tpu_custom_call.1} parent=63 // pred_check_branch
          %437 = sbr.rel (%p435) target = $region68
        $region67: #{tpu_custom_call.1} parent=63 // pred_region
          %s438 = sand.u32 %s38, 1
          %s439 = scalar_lea.sflag [#allocation3], %s438
          %s440 = sand.u32 %s38, 1
          %s441 = smul.addr %s440, 4
          %s442 = scalar_lea.vmem [#allocation2], %s441
          %s444 = ssub.s32 64, 64
          %445 = vsyncadd %s439, %s444
          %s446 = smul.addr %s28, 64
          %s447 = scalar_lea.hbm %s0, %s446
          %s449 = sshll.u32 %s442, 4
          %s450 = int_to_ptr.vmem [resolvable:$true] %s449
          %452 = dma.hbm_to_vmem [thread:$0]  %s447, 64, %s450, %s439
        $region68: #{tpu_custom_call.1} parent=63 // pred_fallthru
          _
      $region64: #{tpu_custom_call.1} parent=5 // pred_fallthru
        _
      %p453 = scmp.le.s32.totalorder 1, %s28
      %p454 = scmp.lt.s32.totalorder %s28, 3
      %p455 = pnand %p453, %p454
      %p456 = pneg %p455
      // Predicated region
      $region69: #{tpu_custom_call.1} parent=5 // pred_check
        _
      $region70: #{tpu_custom_call.1} parent=5 // pred_check_branch
        %458 = sbr.rel (%p455) target = $region72
      $region71: #{tpu_custom_call.1} parent=5 // pred_region
        %s459 = ssub.s32 %s28, 1
        %s460 = sand.u32 %s41, 1
        %s461 = scalar_lea.sflag [#allocation3], %s460
        %s462 = sand.u32 %s41, 1
        %s463 = smul.addr %s462, 4
        %s464 = scalar_lea.vmem [#allocation2], %s463
        // Predicated region
        $region73: #{tpu_custom_call.1} parent=71 // pred_check
          %p465 = pneg %p54
        $region74: #{tpu_custom_call.1} parent=71 // pred_check_branch
          %467 = sbr.rel (%p465) target = $region76
        $region75: #{tpu_custom_call.1} parent=71 // pred_region
          %468 = dma.done %s461, 64
        $region76: #{tpu_custom_call.1} parent=71 // pred_fallthru
          _
        // Predicated region
        $region77: #{tpu_custom_call.1} parent=71 // pred_check
          %p469 = pneg %p117
        $region78: #{tpu_custom_call.1} parent=71 // pred_check_branch
          %471 = sbr.rel (%p469) target = $region80
        $region79: #{tpu_custom_call.1} parent=71 // pred_region
          %472 = dma.done [#allocation6], 16
        $region80: #{tpu_custom_call.1} parent=71 // pred_fallthru
          _
        // Predicated region
        $region81: #{tpu_custom_call.1} parent=71 // pred_check
          %p473 = pneg %p159
        $region82: #{tpu_custom_call.1} parent=71 // pred_check_branch
          %475 = sbr.rel (%p473) target = $region84
        $region83: #{tpu_custom_call.1} parent=71 // pred_region
          %476 = dma.done [#allocation6], 3072
        $region84: #{tpu_custom_call.1} parent=71 // pred_fallthru
          _
        // Predicated region
        $region85: #{tpu_custom_call.1} parent=71 // pred_check
          %p477 = pneg %p201
        $region86: #{tpu_custom_call.1} parent=71 // pred_check_branch
          %479 = sbr.rel (%p477) target = $region88
        $region87: #{tpu_custom_call.1} parent=71 // pred_region
          %480 = dma.done [#allocation9], 1024
        $region88: #{tpu_custom_call.1} parent=71 // pred_fallthru
          _
        // Predicated region
        $region89: #{tpu_custom_call.1} parent=71 // pred_check
          %p481 = pneg %p243
        $region90: #{tpu_custom_call.1} parent=71 // pred_check_branch
          %483 = sbr.rel (%p481) target = $region92
        $region91: #{tpu_custom_call.1} parent=71 // pred_region
          %484 = dma.done [#allocation9], 8192
        $region92: #{tpu_custom_call.1} parent=71 // pred_fallthru
          _
        // Predicated region
        $region93: #{tpu_custom_call.1} parent=71 // pred_check
          %p485 = pneg %p285
        $region94: #{tpu_custom_call.1} parent=71 // pred_check_branch
          %487 = sbr.rel (%p485) target = $region96
        $region95: #{tpu_custom_call.1} parent=71 // pred_region
          %488 = dma.done [#allocation12], 4096
        $region96: #{tpu_custom_call.1} parent=71 // pred_fallthru
          _
        %s489 = sand.u32 %s41, 1
        %s490 = scalar_lea.sflag [#allocation3], %s489
        %s491 = sand.u32 %s41, 1
        %s492 = smul.addr %s491, 4
        %s493 = scalar_lea.vmem [#allocation2], %s492
        %p494 = pneg %p54
        %p495 = pneg %p51
        %p496 = pneg %p75
        %p497 = pneg %p72
        %p498 = pneg %p96
        %p499 = pneg %p93
        %p500 = pneg %p117
        %p501 = pneg %p114
        %p502 = pneg %p138
        %p503 = pneg %p135
        %p504 = pneg %p159
        %p505 = pneg %p156
        %p506 = pneg %p180
        %p507 = pneg %p177
        %p508 = pneg %p201
        %p509 = pneg %p198
        %p510 = pneg %p222
        %p511 = pneg %p219
        %p512 = pneg %p243
        %p513 = pneg %p240
        %p514 = pneg %p264
        %p515 = pneg %p261
        %p516 = pneg %p285
        %p517 = pneg %p282
        %p518 = pneg %p306
        %p519 = pneg %p303
        %p520 = pneg %p332
        %p521 = pneg %p329
        %s522 = sand.u32 %s319, 1
        %s523 = scalar_lea.sflag [#allocation4], %s522
        %s524 = sand.u32 %s319, 1
        %s525 = smul.addr %s524, 4
        %s526 = scalar_lea.vmem [#allocation13], %s525
        %v528 = vld [vmem:[%s464] sm:$0xf]
        %v529 = vunpack.c.l.bf16 %v528
        %v530 = vld [vmem:[%s1] sm:$0x1]
        %v531 = vld [vmem:[%s2] sm:$0x1]
        %532 = vadd.xlane.f32.xlu0 %v529
        %v533 = vpop.xlane.xlu0 %532
        %v534 = vrcp.pop 128.0
        %v535 = vmul.f32 %v533, %v534
        %v536 = vsub.f32 %v529, %v535
        %v537 = vmul.f32 %v536, %v536
        %538 = vadd.xlane.f32.xlu0 %v537
        %v539 = vpop.xlane.xlu0 %538
        %v540 = vmul.f32 %v539, %v534
        %v541 = vadd.f32 %v540, 1e-05
        %v542 = vrsqrt.pop %v541
        %v543 = vmul.f32 %v536, %v542
        %v545 = vlaneseq
        %v546 = vshrl.u32 %v545, 7
        %v547 = vsub.s32 0, %v546
        %v548 = vrot.slane %v530, %v547
        %v550 = vmul.f32 %v543, %v548
        %v552 = vlaneseq
        %v553 = vshrl.u32 %v552, 7
        %v554 = vsub.s32 0, %v553
        %v555 = vrot.slane %v531, %v554
        %v557 = vadd.f32 %v550, %v555
        %v558 = vpack.c.bf16 %v557, %v557
        %v559 = vld [vmem:[#allocation7] sm:$0xff]
        %v560 = vld [vmem:[#allocation7 + $0x8] sm:$0xf]
        %v561 = vld [vmem:[#allocation7 + $0xc] sm:$0xff]
        %v562 = vld [vmem:[#allocation7 + $0x14] sm:$0xf]
        %v563 = vld [vmem:[#allocation7 + $0x18] sm:$0xff]
        %v564 = vld [vmem:[#allocation7 + $0x20] sm:$0xf]
        %v565 = vld [vmem:[#allocation7 + $0x24] sm:$0xff]
        %v566 = vld [vmem:[#allocation7 + $0x2c] sm:$0xf]
        %v567 = vld [vmem:[#allocation7 + $0x30] sm:$0xff]
        %v568 = vld [vmem:[#allocation7 + $0x38] sm:$0xf]
        %v569 = vld [vmem:[#allocation7 + $0x3c] sm:$0xff]
        %v570 = vld [vmem:[#allocation7 + $0x44] sm:$0xf]
        %v571 = vld [vmem:[#allocation7 + $0x48] sm:$0xff]
        %v572 = vld [vmem:[#allocation7 + $0x50] sm:$0xf]
        %v573 = vld [vmem:[#allocation7 + $0x54] sm:$0xff]
        %v574 = vld [vmem:[#allocation7 + $0x5c] sm:$0xf]
        %v575 = vld [vmem:[#allocation7 + $0x60] sm:$0xff]
        %v576 = vld [vmem:[#allocation7 + $0x68] sm:$0xf]
        %v577 = vld [vmem:[#allocation7 + $0x6c] sm:$0xff]
        %v578 = vld [vmem:[#allocation7 + $0x74] sm:$0xf]
        %v579 = vld [vmem:[#allocation7 + $0x78] sm:$0xff]
        %v580 = vld [vmem:[#allocation7 + $0x80] sm:$0xf]
        %v581 = vld [vmem:[#allocation7 + $0x84] sm:$0xff]
        %v582 = vld [vmem:[#allocation7 + $0x8c] sm:$0xf]
        %v583 = vld [vmem:[#allocation7 + $0x90] sm:$0xff]
        %v584 = vld [vmem:[#allocation7 + $0x98] sm:$0xf]
        %v585 = vld [vmem:[#allocation7 + $0x9c] sm:$0xff]
        %v586 = vld [vmem:[#allocation7 + $0xa4] sm:$0xf]
        %v587 = vld [vmem:[#allocation7 + $0xa8] sm:$0xff]
        %v588 = vld [vmem:[#allocation7 + $0xb0] sm:$0xf]
        %v589 = vld [vmem:[#allocation7 + $0xb4] sm:$0xff]
        %v590 = vld [vmem:[#allocation7 + $0xbc] sm:$0xf]
        %v591 = vld [vmem:[%s6] sm:$0x7]
        %v593 = vlaneseq
        %v594 = vshrl.u32 %v593, 7
        %v595 = vsub.s32 0, %v594
        %v596 = vrot.slane %v591, %v595
        %v597 = vlaneseq
        %v598 = vshrl.u32 %v597, 7
        %v599 = vsub.s32 1, %v598
        %v600 = vrot.slane %v591, %v599
        %v601 = vlaneseq
        %v602 = vshrl.u32 %v601, 7
        %v603 = vsub.s32 2, %v602
        %v604 = vrot.slane %v591, %v603
        %v640 = vunpack.c.l.b16 %v559
        %v641 = vunpack.c.h.b16 %v559
        %v642 = vunpack.c.l.b16 %v560
        %v643 = vunpack.c.l.b16 %v561
        %v644 = vunpack.c.h.b16 %v561
        %v645 = vunpack.c.l.b16 %v562
        %v646 = vunpack.c.l.b16 %v563
        %v647 = vunpack.c.h.b16 %v563
        %v648 = vunpack.c.l.b16 %v564
        %v649 = vunpack.c.l.b16 %v565
        %v650 = vunpack.c.h.b16 %v565
        %v651 = vunpack.c.l.b16 %v566
        %v652 = vunpack.c.l.b16 %v567
        %v653 = vunpack.c.h.b16 %v567
        %v654 = vunpack.c.l.b16 %v568
        %v655 = vunpack.c.l.b16 %v569
        %v656 = vunpack.c.h.b16 %v569
        %v657 = vunpack.c.l.b16 %v570
        %v658 = vunpack.c.l.b16 %v571
        %v659 = vunpack.c.h.b16 %v571
        %v660 = vunpack.c.l.b16 %v572
        %v661 = vunpack.c.l.b16 %v573
        %v662 = vunpack.c.h.b16 %v573
        %v663 = vunpack.c.l.b16 %v574
        %v664 = vunpack.c.l.b16 %v575
        %v665 = vunpack.c.h.b16 %v575
        %v666 = vunpack.c.l.b16 %v576
        %v667 = vunpack.c.l.b16 %v577
        %v668 = vunpack.c.h.b16 %v577
        %v669 = vunpack.c.l.b16 %v578
        %v670 = vunpack.c.l.b16 %v579
        %v671 = vunpack.c.h.b16 %v579
        %v672 = vunpack.c.l.b16 %v580
        %v673 = vunpack.c.l.b16 %v581
        %v674 = vunpack.c.h.b16 %v581
        %v675 = vunpack.c.l.b16 %v582
        %v676 = vunpack.c.l.b16 %v583
        %v677 = vunpack.c.h.b16 %v583
        %v678 = vunpack.c.l.b16 %v584
        %v679 = vunpack.c.l.b16 %v585
        %v680 = vunpack.c.h.b16 %v585
        %v681 = vunpack.c.l.b16 %v586
        %v682 = vunpack.c.l.b16 %v587
        %v683 = vunpack.c.h.b16 %v587
        %v684 = vunpack.c.l.b16 %v588
        %v685 = vunpack.c.l.b16 %v589
        %v686 = vunpack.c.h.b16 %v589
        %v687 = vunpack.c.l.b16 %v590
        %v688 = vpack.c.b16 %v643, %v640
        %v689 = vpack.c.b16 %v644, %v641
        %v690 = vpack.c.b16 %v645, %v642
        %v691 = vpack.c.b16 %v649, %v646
        %v692 = vpack.c.b16 %v650, %v647
        %v693 = vpack.c.b16 %v651, %v648
        %v694 = vpack.c.b16 %v655, %v652
        %v695 = vpack.c.b16 %v656, %v653
        %v696 = vpack.c.b16 %v657, %v654
        %v697 = vpack.c.b16 %v661, %v658
        %v698 = vpack.c.b16 %v662, %v659
        %v699 = vpack.c.b16 %v663, %v660
        %v700 = vpack.c.b16 %v667, %v664
        %v701 = vpack.c.b16 %v668, %v665
        %v702 = vpack.c.b16 %v669, %v666
        %v703 = vpack.c.b16 %v673, %v670
        %v704 = vpack.c.b16 %v674, %v671
        %v705 = vpack.c.b16 %v675, %v672
        %v706 = vpack.c.b16 %v679, %v676
        %v707 = vpack.c.b16 %v680, %v677
        %v708 = vpack.c.b16 %v681, %v678
        %v709 = vpack.c.b16 %v685, %v682
        %v710 = vpack.c.b16 %v686, %v683
        %v711 = vpack.c.b16 %v687, %v684
        %736 = vmatprep.subr.bf16.mxu0 %v710
        %737 = vmatpush1.bf16.msra.mxu0 %v709
        %738 = vmatprep.subr.bf16.mxu0 %v707
        %739 = vmatpush1.bf16.msra.mxu0 %v706
        %740 = vmatprep.subr.bf16.mxu0 %v704
        %741 = vmatpush1.bf16.msra.mxu0 %v703
        %742 = vmatprep.subr.bf16.mxu0 %v701
        %743 = vmatpush1.bf16.msra.mxu0 %v700
        %744 = vmatprep.subr.bf16.mxu0 %v698
        %745 = vmatpush1.bf16.msra.mxu0 %v697
        %746 = vmatprep.subr.bf16.mxu0 %v695
        %747 = vmatpush1.bf16.msra.mxu0 %v694
        %748 = vmatprep.subr.bf16.mxu0 %v692
        %749 = vmatpush1.bf16.msra.mxu0 %v691
        %750 = vmatprep.subr.bf16.mxu0 %v689
        %751 = vmatpush1.bf16.msra.mxu0 %v688
        %752 = vmatprep.subr.bf16.mxu0 0
        %753 = vmatpush2.bf16.msra.mxu0 0
        %754 = vmatprep.subr.bf16.mxu0 0
        %755 = vmatpush2.bf16.msra.mxu0 0
        %756 = vmatprep.subr.bf16.mxu0 0
        %757 = vmatpush2.bf16.msra.mxu0 0
        %758 = vmatprep.subr.bf16.mxu0 0
        %759 = vmatpush2.bf16.msra.mxu0 0
        %760 = vmatprep.subr.bf16.mxu0 0
        %761 = vmatpush2.bf16.msra.mxu0 0
        %762 = vmatprep.subr.bf16.mxu0 0
        %763 = vmatpush2.bf16.msra.mxu0 0
        %764 = vmatprep.subr.bf16.mxu0 0
        %765 = vmatpush2.bf16.msra.mxu0 0
        %766 = vmatprep.subr.bf16.mxu0 0
        %767 = vmatpush2.bf16.msra.mxu0 0
        %768 = vmatprep.mubr.bf16.mxu0 0
        %769 = vmatmul.mubr.bf16.gmra.mxu0 %v558
        %v770 = vpop.f32.mrf.mxu0
        %v771 = vadd.f32 %v596, %v770
        %v772 = vpop.f32.mrf.mxu0
        %v773 = vadd.f32 %v600, %v772
        %v774 = vpop.f32.mrf.mxu0
        %v775 = vpop.f32.mrf.mxu0
        %776 = vdwg.mxu0
        %777 = vmatprep.subr.bf16.mxu0 0
        %778 = vmatpush1.bf16.msra.mxu0 %v711
        %779 = vmatprep.subr.bf16.mxu0 0
        %780 = vmatpush1.bf16.msra.mxu0 %v708
        %781 = vmatprep.subr.bf16.mxu0 0
        %782 = vmatpush1.bf16.msra.mxu0 %v705
        %783 = vmatprep.subr.bf16.mxu0 0
        %784 = vmatpush1.bf16.msra.mxu0 %v702
        %785 = vmatprep.subr.bf16.mxu0 0
        %786 = vmatpush1.bf16.msra.mxu0 %v699
        %787 = vmatprep.subr.bf16.mxu0 0
        %788 = vmatpush1.bf16.msra.mxu0 %v696
        %789 = vmatprep.subr.bf16.mxu0 0
        %790 = vmatpush1.bf16.msra.mxu0 %v693
        %791 = vmatprep.subr.bf16.mxu0 0
        %792 = vmatpush1.bf16.msra.mxu0 %v690
        %793 = vmatprep.subr.bf16.mxu0 0
        %794 = vmatpush2.bf16.msra.mxu0 0
        %795 = vmatprep.subr.bf16.mxu0 0
        %796 = vmatpush2.bf16.msra.mxu0 0
        %797 = vmatprep.subr.bf16.mxu0 0
        %798 = vmatpush2.bf16.msra.mxu0 0
        %799 = vmatprep.subr.bf16.mxu0 0
        %800 = vmatpush2.bf16.msra.mxu0 0
        %801 = vmatprep.subr.bf16.mxu0 0
        %802 = vmatpush2.bf16.msra.mxu0 0
        %803 = vmatprep.subr.bf16.mxu0 0
        %804 = vmatpush2.bf16.msra.mxu0 0
        %805 = vmatprep.subr.bf16.mxu0 0
        %806 = vmatpush2.bf16.msra.mxu0 0
        %807 = vmatprep.subr.bf16.mxu0 0
        %808 = vmatpush2.bf16.msra.mxu0 0
        %809 = vmatprep.mubr.bf16.mxu0 0
        %810 = vmatmul.mubr.bf16.gmra.mxu0 %v558
        %v811 = vpop.f32.mrf.mxu0
        %v812 = vadd.f32 %v604, %v811
        %v813 = vpop.f32.mrf.mxu0
        %v814 = vpop.f32.mrf.mxu0
        %v815 = vpop.f32.mrf.mxu0
        %816 = vdwg.mxu0
        %v817 = vmul.f32 %v771, 0.17677669
        %v818 = vpack.c.bf16 %v817, %v817
        %v819 = vpack.c.bf16 %v773, %v773
        %v820 = vpack.c.bf16 %v812, %v812
        %vm821 = vcmask 261120
        %v823 = vsel %vm821, %v818, 0
        %v826 = vsel %vm821, %v819, 0
        %828 = vmatprep.subr.bf16.mxu0 0
        %829 = vmatpush1.bf16.xpose.msra.mxu0 0
        %830 = vmatprep.subr.bf16.mxu0 0
        %831 = vmatpush1.bf16.xpose.msra.mxu0 0
        %832 = vmatprep.subr.bf16.mxu0 0
        %833 = vmatpush1.bf16.xpose.msra.mxu0 0
        %834 = vmatprep.subr.bf16.mxu0 0
        %835 = vmatpush1.bf16.xpose.msra.mxu0 0
        %836 = vmatprep.subr.bf16.mxu0 0
        %837 = vmatpush1.bf16.xpose.msra.mxu0 0
        %838 = vmatprep.subr.bf16.mxu0 0
        %839 = vmatpush1.bf16.xpose.msra.mxu0 0
        %840 = vmatprep.subr.bf16.mxu0 0
        %841 = vmatpush1.bf16.xpose.msra.mxu0 0
        %842 = vmatprep.subr.bf16.mxu0 0
        %843 = vmatpush1.bf16.xpose.msra.mxu0 %v826
        %844 = vmatprep.subr.bf16.mxu0 0
        %845 = vmatpush2.bf16.xpose.msra.mxu0 0
        %846 = vmatprep.subr.bf16.mxu0 0
        %847 = vmatpush2.bf16.xpose.msra.mxu0 0
        %848 = vmatprep.subr.bf16.mxu0 0
        %849 = vmatpush2.bf16.xpose.msra.mxu0 0
        %850 = vmatprep.subr.bf16.mxu0 0
        %851 = vmatpush2.bf16.xpose.msra.mxu0 0
        %852 = vmatprep.subr.bf16.mxu0 0
        %853 = vmatpush2.bf16.xpose.msra.mxu0 0
        %854 = vmatprep.subr.bf16.mxu0 0
        %855 = vmatpush2.bf16.xpose.msra.mxu0 0
        %856 = vmatprep.subr.bf16.mxu0 0
        %857 = vmatpush2.bf16.xpose.msra.mxu0 0
        %858 = vmatprep.subr.bf16.mxu0 0
        %859 = vmatpush2.bf16.xpose.msra.mxu0 0
        %860 = vmatprep.mubr.bf16.mxu0 0
        %861 = vmatmul.mubr.bf16.gmra.mxu0 %v823
        %v862 = vpop.f32.mrf.mxu0
        %v863 = vadd.f32 0.0, %v862
        %v864 = vpop.f32.mrf.mxu0
        %v865 = vpop.f32.mrf.mxu0
        %v866 = vpop.f32.mrf.mxu0
        %867 = vdwg.mxu0
        %vm868 = vcmask 64512
        %v869 = vsel %vm868, %v863, -inf
        %870 = vmax.xlane.f32.xlu0 %v869
        %v871 = vpop.xlane.xlu0 %870
        %v872 = vsub.f32 %v863, %v871
        %v873 = vmul.f32 %v872, 1.442695
        %v874 = vpow.pop %v873
        %v875 = vsel %vm868, %v874, 0.0
        %876 = vadd.xlane.f32.xlu0 %v875
        %v877 = vpop.xlane.xlu0 %876
        %v878 = vrcp.pop %v877
        %v879 = vmul.f32 %v874, %v878
        %v880 = vpack.c.bf16 %v879, %v879
        %v882 = vsel %vm868, %v880, 0
        %vm884 = vcmask 1043456
        %v886 = vsel %vm884, %v820, 0
        %888 = vmatprep.subr.bf16.mxu0 0
        %889 = vmatpush1.bf16.msra.mxu0 0
        %890 = vmatprep.subr.bf16.mxu0 0
        %891 = vmatpush1.bf16.msra.mxu0 0
        %892 = vmatprep.subr.bf16.mxu0 0
        %893 = vmatpush1.bf16.msra.mxu0 0
        %894 = vmatprep.subr.bf16.mxu0 0
        %895 = vmatpush1.bf16.msra.mxu0 0
        %896 = vmatprep.subr.bf16.mxu0 0
        %897 = vmatpush1.bf16.msra.mxu0 0
        %898 = vmatprep.subr.bf16.mxu0 0
        %899 = vmatpush1.bf16.msra.mxu0 0
        %900 = vmatprep.subr.bf16.mxu0 0
        %901 = vmatpush1.bf16.msra.mxu0 0
        %902 = vmatprep.subr.bf16.mxu0 0
        %903 = vmatpush1.bf16.msra.mxu0 %v886
        %904 = vmatprep.subr.bf16.mxu0 0
        %905 = vmatpush2.bf16.msra.mxu0 0
        %906 = vmatprep.subr.bf16.mxu0 0
        %907 = vmatpush2.bf16.msra.mxu0 0
        %908 = vmatprep.subr.bf16.mxu0 0
        %909 = vmatpush2.bf16.msra.mxu0 0
        %910 = vmatprep.subr.bf16.mxu0 0
        %911 = vmatpush2.bf16.msra.mxu0 0
        %912 = vmatprep.subr.bf16.mxu0 0
        %913 = vmatpush2.bf16.msra.mxu0 0
        %914 = vmatprep.subr.bf16.mxu0 0
        %915 = vmatpush2.bf16.msra.mxu0 0
        %916 = vmatprep.subr.bf16.mxu0 0
        %917 = vmatpush2.bf16.msra.mxu0 0
        %918 = vmatprep.subr.bf16.mxu0 0
        %919 = vmatpush2.bf16.msra.mxu0 0
        %920 = vmatprep.mubr.bf16.mxu0 0
        %921 = vmatmul.mubr.bf16.gmra.mxu0 %v882
        %v922 = vpop.f32.mrf.mxu0
        %v923 = vadd.f32 0.0, %v922
        %v924 = vpop.f32.mrf.mxu0
        %v925 = vpop.f32.mrf.mxu0
        %v926 = vpop.f32.mrf.mxu0
        %927 = vdwg.mxu0
        %v928 = vpack.c.bf16 %v923, %v923
        %v929 = vld [vmem:[#allocation8] sm:$0xf]
        %v930 = vld [vmem:[#allocation8 + $0x4] sm:$0xf]
        %v931 = vld [vmem:[#allocation8 + $0x8] sm:$0xf]
        %v932 = vld [vmem:[#allocation8 + $0xc] sm:$0xf]
        %934 = vrot.lane.b32.xlu0 %v818, 96
        %v935 = vpop.permute.xlu0 %934
        %v937 = vsel %vm821, %v935, 0
        %939 = vmatprep.subr.bf16.mxu0 0
        %940 = vmatpush1.bf16.xpose.msra.mxu0 0
        %941 = vmatprep.subr.bf16.mxu0 0
        %942 = vmatpush1.bf16.xpose.msra.mxu0 0
        %943 = vmatprep.subr.bf16.mxu0 0
        %944 = vmatpush1.bf16.xpose.msra.mxu0 0
        %945 = vmatprep.subr.bf16.mxu0 0
        %946 = vmatpush1.bf16.xpose.msra.mxu0 0
        %947 = vmatprep.subr.bf16.mxu0 0
        %948 = vmatpush1.bf16.xpose.msra.mxu0 0
        %949 = vmatprep.subr.bf16.mxu0 0
        %950 = vmatpush1.bf16.xpose.msra.mxu0 0
        %951 = vmatprep.subr.bf16.mxu0 0
        %952 = vmatpush1.bf16.xpose.msra.mxu0 0
        %953 = vmatprep.subr.bf16.mxu0 0
        %954 = vmatpush1.bf16.xpose.msra.mxu0 %v826
        %955 = vmatprep.subr.bf16.mxu0 0
        %956 = vmatpush2.bf16.xpose.msra.mxu0 0
        %957 = vmatprep.subr.bf16.mxu0 0
        %958 = vmatpush2.bf16.xpose.msra.mxu0 0
        %959 = vmatprep.subr.bf16.mxu0 0
        %960 = vmatpush2.bf16.xpose.msra.mxu0 0
        %961 = vmatprep.subr.bf16.mxu0 0
        %962 = vmatpush2.bf16.xpose.msra.mxu0 0
        %963 = vmatprep.subr.bf16.mxu0 0
        %964 = vmatpush2.bf16.xpose.msra.mxu0 0
        %965 = vmatprep.subr.bf16.mxu0 0
        %966 = vmatpush2.bf16.xpose.msra.mxu0 0
        %967 = vmatprep.subr.bf16.mxu0 0
        %968 = vmatpush2.bf16.xpose.msra.mxu0 0
        %969 = vmatprep.subr.bf16.mxu0 0
        %970 = vmatpush2.bf16.xpose.msra.mxu0 0
        %971 = vmatprep.mubr.bf16.mxu0 0
        %972 = vmatmul.mubr.bf16.gmra.mxu0 %v937
        %v973 = vpop.f32.mrf.mxu0
        %v974 = vadd.f32 0.0, %v973
        %v975 = vpop.f32.mrf.mxu0
        %v976 = vpop.f32.mrf.mxu0
        %v977 = vpop.f32.mrf.mxu0
        %978 = vdwg.mxu0
        %v979 = vsel %vm868, %v974, -inf
        %980 = vmax.xlane.f32.xlu0 %v979
        %v981 = vpop.xlane.xlu0 %980
        %v982 = vsub.f32 %v974, %v981
        %v983 = vmul.f32 %v982, 1.442695
        %v984 = vpow.pop %v983
        %v985 = vsel %vm868, %v984, 0.0
        %986 = vadd.xlane.f32.xlu0 %v985
        %v987 = vpop.xlane.xlu0 %986
        %v988 = vrcp.pop %v987
        %v989 = vmul.f32 %v984, %v988
        %v990 = vpack.c.bf16 %v989, %v989
        %v992 = vsel %vm868, %v990, 0
        %994 = vmatprep.subr.bf16.mxu0 0
        %995 = vmatpush1.bf16.msra.mxu0 0
        %996 = vmatprep.subr.bf16.mxu0 0
        %997 = vmatpush1.bf16.msra.mxu0 0
        %998 = vmatprep.subr.bf16.mxu0 0
        %999 = vmatpush1.bf16.msra.mxu0 0
        %1000 = vmatprep.subr.bf16.mxu0 0
        %1001 = vmatpush1.bf16.msra.mxu0 0
        %1002 = vmatprep.subr.bf16.mxu0 0
        %1003 = vmatpush1.bf16.msra.mxu0 0
        %1004 = vmatprep.subr.bf16.mxu0 0
        %1005 = vmatpush1.bf16.msra.mxu0 0
        %1006 = vmatprep.subr.bf16.mxu0 0
        %1007 = vmatpush1.bf16.msra.mxu0 0
        %1008 = vmatprep.subr.bf16.mxu0 0
        %1009 = vmatpush1.bf16.msra.mxu0 %v886
        %1010 = vmatprep.subr.bf16.mxu0 0
        %1011 = vmatpush2.bf16.msra.mxu0 0
        %1012 = vmatprep.subr.bf16.mxu0 0
        %1013 = vmatpush2.bf16.msra.mxu0 0
        %1014 = vmatprep.subr.bf16.mxu0 0
        %1015 = vmatpush2.bf16.msra.mxu0 0
        %1016 = vmatprep.subr.bf16.mxu0 0
        %1017 = vmatpush2.bf16.msra.mxu0 0
        %1018 = vmatprep.subr.bf16.mxu0 0
        %1019 = vmatpush2.bf16.msra.mxu0 0
        %1020 = vmatprep.subr.bf16.mxu0 0
        %1021 = vmatpush2.bf16.msra.mxu0 0
        %1022 = vmatprep.subr.bf16.mxu0 0
        %1023 = vmatpush2.bf16.msra.mxu0 0
        %1024 = vmatprep.subr.bf16.mxu0 0
        %1025 = vmatpush2.bf16.msra.mxu0 0
        %1026 = vmatprep.mubr.bf16.mxu0 0
        %1027 = vmatmul.mubr.bf16.gmra.mxu0 %v992
        %v1028 = vpop.f32.mrf.mxu0
        %v1029 = vadd.f32 0.0, %v1028
        %v1030 = vpop.f32.mrf.mxu0
        %v1031 = vpop.f32.mrf.mxu0
        %v1032 = vpop.f32.mrf.mxu0
        %1033 = vdwg.mxu0
        %v1034 = vpack.c.bf16 %v1029, %v1029
        %v1035 = vld [vmem:[#allocation8 + $0x10] sm:$0xf]
        %v1036 = vld [vmem:[#allocation8 + $0x14] sm:$0xf]
        %v1037 = vld [vmem:[#allocation8 + $0x18] sm:$0xf]
        %v1038 = vld [vmem:[#allocation8 + $0x1c] sm:$0xf]
        %v1043 = vunpack.c.l.b16 %v1035
        %v1044 = vunpack.c.l.b16 %v1036
        %v1045 = vunpack.c.l.b16 %v1037
        %v1046 = vunpack.c.l.b16 %v1038
        %v1047 = vpack.c.b16 %v1044, %v1043
        %v1048 = vpack.c.b16 %v1046, %v1045
        %v1052 = vsel %vm821, %v1034, 0
        %1054 = vmatprep.subr.bf16.mxu0 0
        %1055 = vmatpush1.bf16.msra.mxu0 0
        %1056 = vmatprep.subr.bf16.mxu0 0
        %1057 = vmatpush1.bf16.msra.mxu0 0
        %1058 = vmatprep.subr.bf16.mxu0 0
        %1059 = vmatpush1.bf16.msra.mxu0 0
        %1060 = vmatprep.subr.bf16.mxu0 0
        %1061 = vmatpush1.bf16.msra.mxu0 0
        %1062 = vmatprep.subr.bf16.mxu0 0
        %1063 = vmatpush1.bf16.msra.mxu0 0
        %1064 = vmatprep.subr.bf16.mxu0 0
        %1065 = vmatpush1.bf16.msra.mxu0 0
        %1066 = vmatprep.subr.bf16.mxu0 0
        %1067 = vmatpush1.bf16.msra.mxu0 %v1048
        %1068 = vmatprep.subr.bf16.mxu0 0
        %1069 = vmatpush1.bf16.msra.mxu0 %v1047
        %1070 = vmatprep.subr.bf16.mxu0 0
        %1071 = vmatpush2.bf16.msra.mxu0 0
        %1072 = vmatprep.subr.bf16.mxu0 0
        %1073 = vmatpush2.bf16.msra.mxu0 0
        %1074 = vmatprep.subr.bf16.mxu0 0
        %1075 = vmatpush2.bf16.msra.mxu0 0
        %1076 = vmatprep.subr.bf16.mxu0 0
        %1077 = vmatpush2.bf16.msra.mxu0 0
        %1078 = vmatprep.subr.bf16.mxu0 0
        %1079 = vmatpush2.bf16.msra.mxu0 0
        %1080 = vmatprep.subr.bf16.mxu0 0
        %1081 = vmatpush2.bf16.msra.mxu0 0
        %1082 = vmatprep.subr.bf16.mxu0 0
        %1083 = vmatpush2.bf16.msra.mxu0 0
        %1084 = vmatprep.subr.bf16.mxu0 0
        %1085 = vmatpush2.bf16.msra.mxu0 0
        %1086 = vmatprep.mubr.bf16.mxu0 0
        %1087 = vmatmul.mubr.bf16.gmra.mxu0 %v1052
        %v1088 = vpop.f32.mrf.mxu0
        %v1089 = vadd.f32 0.0, %v1088
        %v1090 = vpop.f32.mrf.mxu0
        %v1091 = vpop.f32.mrf.mxu0
        %v1092 = vpop.f32.mrf.mxu0
        %1093 = vdwg.mxu0
        %v1098 = vunpack.c.l.b16 %v929
        %v1099 = vunpack.c.l.b16 %v930
        %v1100 = vunpack.c.l.b16 %v931
        %v1101 = vunpack.c.l.b16 %v932
        %v1102 = vpack.c.b16 %v1099, %v1098
        %v1103 = vpack.c.b16 %v1101, %v1100
        %v1107 = vsel %vm821, %v928, 0
        %1109 = vmatprep.subr.bf16.mxu0 0
        %1110 = vmatpush1.bf16.msra.mxu0 0
        %1111 = vmatprep.subr.bf16.mxu0 0
        %1112 = vmatpush1.bf16.msra.mxu0 0
        %1113 = vmatprep.subr.bf16.mxu0 0
        %1114 = vmatpush1.bf16.msra.mxu0 0
        %1115 = vmatprep.subr.bf16.mxu0 0
        %1116 = vmatpush1.bf16.msra.mxu0 0
        %1117 = vmatprep.subr.bf16.mxu0 0
        %1118 = vmatpush1.bf16.msra.mxu0 0
        %1119 = vmatprep.subr.bf16.mxu0 0
        %1120 = vmatpush1.bf16.msra.mxu0 0
        %1121 = vmatprep.subr.bf16.mxu0 0
        %1122 = vmatpush1.bf16.msra.mxu0 %v1103
        %1123 = vmatprep.subr.bf16.mxu0 0
        %1124 = vmatpush1.bf16.msra.mxu0 %v1102
        %1125 = vmatprep.subr.bf16.mxu0 0
        %1126 = vmatpush2.bf16.msra.mxu0 0
        %1127 = vmatprep.subr.bf16.mxu0 0
        %1128 = vmatpush2.bf16.msra.mxu0 0
        %1129 = vmatprep.subr.bf16.mxu0 0
        %1130 = vmatpush2.bf16.msra.mxu0 0
        %1131 = vmatprep.subr.bf16.mxu0 0
        %1132 = vmatpush2.bf16.msra.mxu0 0
        %1133 = vmatprep.subr.bf16.mxu0 0
        %1134 = vmatpush2.bf16.msra.mxu0 0
        %1135 = vmatprep.subr.bf16.mxu0 0
        %1136 = vmatpush2.bf16.msra.mxu0 0
        %1137 = vmatprep.subr.bf16.mxu0 0
        %1138 = vmatpush2.bf16.msra.mxu0 0
        %1139 = vmatprep.subr.bf16.mxu0 0
        %1140 = vmatpush2.bf16.msra.mxu0 0
        %1141 = vmatprep.mubr.bf16.mxu0 0
        %1142 = vmatmul.mubr.bf16.gmra.mxu0 %v1107
        %v1143 = vpop.f32.mrf.mxu0
        %v1144 = vadd.f32 %v1089, %v1143
        %v1145 = vpop.f32.mrf.mxu0
        %v1146 = vpop.f32.mrf.mxu0
        %v1147 = vpop.f32.mrf.mxu0
        %1148 = vdwg.mxu0
        %1149 = vrot.lane.b32.xlu0 %v818, 64
        %v1150 = vpop.permute.xlu0 %1149
        %v1152 = vsel %vm821, %v1150, 0
        %1154 = vmatprep.subr.bf16.mxu0 0
        %1155 = vmatpush1.bf16.xpose.msra.mxu0 0
        %1156 = vmatprep.subr.bf16.mxu0 0
        %1157 = vmatpush1.bf16.xpose.msra.mxu0 0
        %1158 = vmatprep.subr.bf16.mxu0 0
        %1159 = vmatpush1.bf16.xpose.msra.mxu0 0
        %1160 = vmatprep.subr.bf16.mxu0 0
        %1161 = vmatpush1.bf16.xpose.msra.mxu0 0
        %1162 = vmatprep.subr.bf16.mxu0 0
        %1163 = vmatpush1.bf16.xpose.msra.mxu0 0
        %1164 = vmatprep.subr.bf16.mxu0 0
        %1165 = vmatpush1.bf16.xpose.msra.mxu0 0
        %1166 = vmatprep.subr.bf16.mxu0 0
        %1167 = vmatpush1.bf16.xpose.msra.mxu0 0
        %1168 = vmatprep.subr.bf16.mxu0 0
        %1169 = vmatpush1.bf16.xpose.msra.mxu0 %v826
        %1170 = vmatprep.subr.bf16.mxu0 0
        %1171 = vmatpush2.bf16.xpose.msra.mxu0 0
        %1172 = vmatprep.subr.bf16.mxu0 0
        %1173 = vmatpush2.bf16.xpose.msra.mxu0 0
        %1174 = vmatprep.subr.bf16.mxu0 0
        %1175 = vmatpush2.bf16.xpose.msra.mxu0 0
        %1176 = vmatprep.subr.bf16.mxu0 0
        %1177 = vmatpush2.bf16.xpose.msra.mxu0 0
        %1178 = vmatprep.subr.bf16.mxu0 0
        %1179 = vmatpush2.bf16.xpose.msra.mxu0 0
        %1180 = vmatprep.subr.bf16.mxu0 0
        %1181 = vmatpush2.bf16.xpose.msra.mxu0 0
        %1182 = vmatprep.subr.bf16.mxu0 0
        %1183 = vmatpush2.bf16.xpose.msra.mxu0 0
        %1184 = vmatprep.subr.bf16.mxu0 0
        %1185 = vmatpush2.bf16.xpose.msra.mxu0 0
        %1186 = vmatprep.mubr.bf16.mxu0 0
        %1187 = vmatmul.mubr.bf16.gmra.mxu0 %v1152
        %v1188 = vpop.f32.mrf.mxu0
        %v1189 = vadd.f32 0.0, %v1188
        %v1190 = vpop.f32.mrf.mxu0
        %v1191 = vpop.f32.mrf.mxu0
        %v1192 = vpop.f32.mrf.mxu0
        %1193 = vdwg.mxu0
        %v1194 = vsel %vm868, %v1189, -inf
        %1195 = vmax.xlane.f32.xlu0 %v1194
        %v1196 = vpop.xlane.xlu0 %1195
        %v1197 = vsub.f32 %v1189, %v1196
        %v1198 = vmul.f32 %v1197, 1.442695
        %v1199 = vpow.pop %v1198
        %v1200 = vsel %vm868, %v1199, 0.0
        %1201 = vadd.xlane.f32.xlu0 %v1200
        %v1202 = vpop.xlane.xlu0 %1201
        %v1203 = vrcp.pop %v1202
        %v1204 = vmul.f32 %v1199, %v1203
        %v1205 = vpack.c.bf16 %v1204, %v1204
        %v1207 = vsel %vm868, %v1205, 0
        %1209 = vmatprep.subr.bf16.mxu0 0
        %1210 = vmatpush1.bf16.msra.mxu0 0
        %1211 = vmatprep.subr.bf16.mxu0 0
        %1212 = vmatpush1.bf16.msra.mxu0 0
        %1213 = vmatprep.subr.bf16.mxu0 0
        %1214 = vmatpush1.bf16.msra.mxu0 0
        %1215 = vmatprep.subr.bf16.mxu0 0
        %1216 = vmatpush1.bf16.msra.mxu0 0
        %1217 = vmatprep.subr.bf16.mxu0 0
        %1218 = vmatpush1.bf16.msra.mxu0 0
        %1219 = vmatprep.subr.bf16.mxu0 0
        %1220 = vmatpush1.bf16.msra.mxu0 0
        %1221 = vmatprep.subr.bf16.mxu0 0
        %1222 = vmatpush1.bf16.msra.mxu0 0
        %1223 = vmatprep.subr.bf16.mxu0 0
        %1224 = vmatpush1.bf16.msra.mxu0 %v886
        %1225 = vmatprep.subr.bf16.mxu0 0
        %1226 = vmatpush2.bf16.msra.mxu0 0
        %1227 = vmatprep.subr.bf16.mxu0 0
        %1228 = vmatpush2.bf16.msra.mxu0 0
        %1229 = vmatprep.subr.bf16.mxu0 0
        %1230 = vmatpush2.bf16.msra.mxu0 0
        %1231 = vmatprep.subr.bf16.mxu0 0
        %1232 = vmatpush2.bf16.msra.mxu0 0
        %1233 = vmatprep.subr.bf16.mxu0 0
        %1234 = vmatpush2.bf16.msra.mxu0 0
        %1235 = vmatprep.subr.bf16.mxu0 0
        %1236 = vmatpush2.bf16.msra.mxu0 0
        %1237 = vmatprep.subr.bf16.mxu0 0
        %1238 = vmatpush2.bf16.msra.mxu0 0
        %1239 = vmatprep.subr.bf16.mxu0 0
        %1240 = vmatpush2.bf16.msra.mxu0 0
        %1241 = vmatprep.mubr.bf16.mxu0 0
        %1242 = vmatmul.mubr.bf16.gmra.mxu0 %v1207
        %v1243 = vpop.f32.mrf.mxu0
        %v1244 = vadd.f32 0.0, %v1243
        %v1245 = vpop.f32.mrf.mxu0
        %v1246 = vpop.f32.mrf.mxu0
        %v1247 = vpop.f32.mrf.mxu0
        %1248 = vdwg.mxu0
        %v1249 = vpack.c.bf16 %v1244, %v1244
        %v1250 = vld [vmem:[#allocation8 + $0x20] sm:$0xf]
        %v1251 = vld [vmem:[#allocation8 + $0x24] sm:$0xf]
        %v1252 = vld [vmem:[#allocation8 + $0x28] sm:$0xf]
        %v1253 = vld [vmem:[#allocation8 + $0x2c] sm:$0xf]
        %v1258 = vunpack.c.l.b16 %v1250
        %v1259 = vunpack.c.l.b16 %v1251
        %v1260 = vunpack.c.l.b16 %v1252
        %v1261 = vunpack.c.l.b16 %v1253
        %v1262 = vpack.c.b16 %v1259, %v1258
        %v1263 = vpack.c.b16 %v1261, %v1260
        %v1267 = vsel %vm821, %v1249, 0
        %1269 = vmatprep.subr.bf16.mxu0 0
        %1270 = vmatpush1.bf16.msra.mxu0 0
        %1271 = vmatprep.subr.bf16.mxu0 0
        %1272 = vmatpush1.bf16.msra.mxu0 0
        %1273 = vmatprep.subr.bf16.mxu0 0
        %1274 = vmatpush1.bf16.msra.mxu0 0
        %1275 = vmatprep.subr.bf16.mxu0 0
        %1276 = vmatpush1.bf16.msra.mxu0 0
        %1277 = vmatprep.subr.bf16.mxu0 0
        %1278 = vmatpush1.bf16.msra.mxu0 0
        %1279 = vmatprep.subr.bf16.mxu0 0
        %1280 = vmatpush1.bf16.msra.mxu0 0
        %1281 = vmatprep.subr.bf16.mxu0 0
        %1282 = vmatpush1.bf16.msra.mxu0 %v1263
        %1283 = vmatprep.subr.bf16.mxu0 0
        %1284 = vmatpush1.bf16.msra.mxu0 %v1262
        %1285 = vmatprep.subr.bf16.mxu0 0
        %1286 = vmatpush2.bf16.msra.mxu0 0
        %1287 = vmatprep.subr.bf16.mxu0 0
        %1288 = vmatpush2.bf16.msra.mxu0 0
        %1289 = vmatprep.subr.bf16.mxu0 0
        %1290 = vmatpush2.bf16.msra.mxu0 0
        %1291 = vmatprep.subr.bf16.mxu0 0
        %1292 = vmatpush2.bf16.msra.mxu0 0
        %1293 = vmatprep.subr.bf16.mxu0 0
        %1294 = vmatpush2.bf16.msra.mxu0 0
        %1295 = vmatprep.subr.bf16.mxu0 0
        %1296 = vmatpush2.bf16.msra.mxu0 0
        %1297 = vmatprep.subr.bf16.mxu0 0
        %1298 = vmatpush2.bf16.msra.mxu0 0
        %1299 = vmatprep.subr.bf16.mxu0 0
        %1300 = vmatpush2.bf16.msra.mxu0 0
        %1301 = vmatprep.mubr.bf16.mxu0 0
        %1302 = vmatmul.mubr.bf16.gmra.mxu0 %v1267
        %v1303 = vpop.f32.mrf.mxu0
        %v1304 = vadd.f32 0.0, %v1303
        %v1305 = vpop.f32.mrf.mxu0
        %v1306 = vpop.f32.mrf.mxu0
        %v1307 = vpop.f32.mrf.mxu0
        %1308 = vdwg.mxu0
        %v1309 = vadd.f32 %v1144, %v1304
        %1310 = vrot.lane.b32.xlu0 %v818, 32
        %v1311 = vpop.permute.xlu0 %1310
        %v1313 = vsel %vm821, %v1311, 0
        %1315 = vmatprep.subr.bf16.mxu0 0
        %1316 = vmatpush1.bf16.xpose.msra.mxu0 0
        %1317 = vmatprep.subr.bf16.mxu0 0
        %1318 = vmatpush1.bf16.xpose.msra.mxu0 0
        %1319 = vmatprep.subr.bf16.mxu0 0
        %1320 = vmatpush1.bf16.xpose.msra.mxu0 0
        %1321 = vmatprep.subr.bf16.mxu0 0
        %1322 = vmatpush1.bf16.xpose.msra.mxu0 0
        %1323 = vmatprep.subr.bf16.mxu0 0
        %1324 = vmatpush1.bf16.xpose.msra.mxu0 0
        %1325 = vmatprep.subr.bf16.mxu0 0
        %1326 = vmatpush1.bf16.xpose.msra.mxu0 0
        %1327 = vmatprep.subr.bf16.mxu0 0
        %1328 = vmatpush1.bf16.xpose.msra.mxu0 0
        %1329 = vmatprep.subr.bf16.mxu0 0
        %1330 = vmatpush1.bf16.xpose.msra.mxu0 %v826
        %1331 = vmatprep.subr.bf16.mxu0 0
        %1332 = vmatpush2.bf16.xpose.msra.mxu0 0
        %1333 = vmatprep.subr.bf16.mxu0 0
        %1334 = vmatpush2.bf16.xpose.msra.mxu0 0
        %1335 = vmatprep.subr.bf16.mxu0 0
        %1336 = vmatpush2.bf16.xpose.msra.mxu0 0
        %1337 = vmatprep.subr.bf16.mxu0 0
        %1338 = vmatpush2.bf16.xpose.msra.mxu0 0
        %1339 = vmatprep.subr.bf16.mxu0 0
        %1340 = vmatpush2.bf16.xpose.msra.mxu0 0
        %1341 = vmatprep.subr.bf16.mxu0 0
        %1342 = vmatpush2.bf16.xpose.msra.mxu0 0
        %1343 = vmatprep.subr.bf16.mxu0 0
        %1344 = vmatpush2.bf16.xpose.msra.mxu0 0
        %1345 = vmatprep.subr.bf16.mxu0 0
        %1346 = vmatpush2.bf16.xpose.msra.mxu0 0
        %1347 = vmatprep.mubr.bf16.mxu0 0
        %1348 = vmatmul.mubr.bf16.gmra.mxu0 %v1313
        %v1349 = vpop.f32.mrf.mxu0
        %v1350 = vadd.f32 0.0, %v1349
        %v1351 = vpop.f32.mrf.mxu0
        %v1352 = vpop.f32.mrf.mxu0
        %v1353 = vpop.f32.mrf.mxu0
        %1354 = vdwg.mxu0
        %v1355 = vsel %vm868, %v1350, -inf
        %1356 = vmax.xlane.f32.xlu0 %v1355
        %v1357 = vpop.xlane.xlu0 %1356
        %v1358 = vsub.f32 %v1350, %v1357
        %v1359 = vmul.f32 %v1358, 1.442695
        %v1360 = vpow.pop %v1359
        %v1361 = vsel %vm868, %v1360, 0.0
        %1362 = vadd.xlane.f32.xlu0 %v1361
        %v1363 = vpop.xlane.xlu0 %1362
        %v1364 = vrcp.pop %v1363
        %v1365 = vmul.f32 %v1360, %v1364
        %v1366 = vpack.c.bf16 %v1365, %v1365
        %v1368 = vsel %vm868, %v1366, 0
        %1370 = vmatprep.subr.bf16.mxu0 0
        %1371 = vmatpush1.bf16.msra.mxu0 0
        %1372 = vmatprep.subr.bf16.mxu0 0
        %1373 = vmatpush1.bf16.msra.mxu0 0
        %1374 = vmatprep.subr.bf16.mxu0 0
        %1375 = vmatpush1.bf16.msra.mxu0 0
        %1376 = vmatprep.subr.bf16.mxu0 0
        %1377 = vmatpush1.bf16.msra.mxu0 0
        %1378 = vmatprep.subr.bf16.mxu0 0
        %1379 = vmatpush1.bf16.msra.mxu0 0
        %1380 = vmatprep.subr.bf16.mxu0 0
        %1381 = vmatpush1.bf16.msra.mxu0 0
        %1382 = vmatprep.subr.bf16.mxu0 0
        %1383 = vmatpush1.bf16.msra.mxu0 0
        %1384 = vmatprep.subr.bf16.mxu0 0
        %1385 = vmatpush1.bf16.msra.mxu0 %v886
        %1386 = vmatprep.subr.bf16.mxu0 0
        %1387 = vmatpush2.bf16.msra.mxu0 0
        %1388 = vmatprep.subr.bf16.mxu0 0
        %1389 = vmatpush2.bf16.msra.mxu0 0
        %1390 = vmatprep.subr.bf16.mxu0 0
        %1391 = vmatpush2.bf16.msra.mxu0 0
        %1392 = vmatprep.subr.bf16.mxu0 0
        %1393 = vmatpush2.bf16.msra.mxu0 0
        %1394 = vmatprep.subr.bf16.mxu0 0
        %1395 = vmatpush2.bf16.msra.mxu0 0
        %1396 = vmatprep.subr.bf16.mxu0 0
        %1397 = vmatpush2.bf16.msra.mxu0 0
        %1398 = vmatprep.subr.bf16.mxu0 0
        %1399 = vmatpush2.bf16.msra.mxu0 0
        %1400 = vmatprep.subr.bf16.mxu0 0
        %1401 = vmatpush2.bf16.msra.mxu0 0
        %1402 = vmatprep.mubr.bf16.mxu0 0
        %1403 = vmatmul.mubr.bf16.gmra.mxu0 %v1368
        %v1404 = vpop.f32.mrf.mxu0
        %v1405 = vadd.f32 0.0, %v1404
        %v1406 = vpop.f32.mrf.mxu0
        %v1407 = vpop.f32.mrf.mxu0
        %v1408 = vpop.f32.mrf.mxu0
        %1409 = vdwg.mxu0
        %v1410 = vpack.c.bf16 %v1405, %v1405
        %v1411 = vld [vmem:[#allocation8 + $0x30] sm:$0xf]
        %v1412 = vld [vmem:[#allocation8 + $0x34] sm:$0xf]
        %v1413 = vld [vmem:[#allocation8 + $0x38] sm:$0xf]
        %v1414 = vld [vmem:[#allocation8 + $0x3c] sm:$0xf]
        %v1419 = vunpack.c.l.b16 %v1411
        %v1420 = vunpack.c.l.b16 %v1412
        %v1421 = vunpack.c.l.b16 %v1413
        %v1422 = vunpack.c.l.b16 %v1414
        %v1423 = vpack.c.b16 %v1420, %v1419
        %v1424 = vpack.c.b16 %v1422, %v1421
        %v1428 = vsel %vm821, %v1410, 0
        %1430 = vmatprep.subr.bf16.mxu0 0
        %1431 = vmatpush1.bf16.msra.mxu0 0
        %1432 = vmatprep.subr.bf16.mxu0 0
        %1433 = vmatpush1.bf16.msra.mxu0 0
        %1434 = vmatprep.subr.bf16.mxu0 0
        %1435 = vmatpush1.bf16.msra.mxu0 0
        %1436 = vmatprep.subr.bf16.mxu0 0
        %1437 = vmatpush1.bf16.msra.mxu0 0
        %1438 = vmatprep.subr.bf16.mxu0 0
        %1439 = vmatpush1.bf16.msra.mxu0 0
        %1440 = vmatprep.subr.bf16.mxu0 0
        %1441 = vmatpush1.bf16.msra.mxu0 0
        %1442 = vmatprep.subr.bf16.mxu0 0
        %1443 = vmatpush1.bf16.msra.mxu0 %v1424
        %1444 = vmatprep.subr.bf16.mxu0 0
        %1445 = vmatpush1.bf16.msra.mxu0 %v1423
        %1446 = vmatprep.subr.bf16.mxu0 0
        %1447 = vmatpush2.bf16.msra.mxu0 0
        %1448 = vmatprep.subr.bf16.mxu0 0
        %1449 = vmatpush2.bf16.msra.mxu0 0
        %1450 = vmatprep.subr.bf16.mxu0 0
        %1451 = vmatpush2.bf16.msra.mxu0 0
        %1452 = vmatprep.subr.bf16.mxu0 0
        %1453 = vmatpush2.bf16.msra.mxu0 0
        %1454 = vmatprep.subr.bf16.mxu0 0
        %1455 = vmatpush2.bf16.msra.mxu0 0
        %1456 = vmatprep.subr.bf16.mxu0 0
        %1457 = vmatpush2.bf16.msra.mxu0 0
        %1458 = vmatprep.subr.bf16.mxu0 0
        %1459 = vmatpush2.bf16.msra.mxu0 0
        %1460 = vmatprep.subr.bf16.mxu0 0
        %1461 = vmatpush2.bf16.msra.mxu0 0
        %1462 = vmatprep.mubr.bf16.mxu0 0
        %1463 = vmatmul.mubr.bf16.gmra.mxu0 %v1428
        %v1464 = vpop.f32.mrf.mxu0
        %v1465 = vadd.f32 0.0, %v1464
        %v1466 = vpop.f32.mrf.mxu0
        %v1467 = vpop.f32.mrf.mxu0
        %v1468 = vpop.f32.mrf.mxu0
        %1469 = vdwg.mxu0
        %v1470 = vadd.f32 %v1309, %v1465
        %v1471 = vadd.f32 %v529, %v1470
        %v1472 = vld [vmem:[%s8] sm:$0x1]
        %v1474 = vlaneseq
        %v1475 = vshrl.u32 %v1474, 7
        %v1476 = vsub.s32 0, %v1475
        %v1477 = vrot.slane %v1472, %v1476
        %v1479 = vadd.f32 %v1471, %v1477
        %v1480 = vld [vmem:[#allocation5] sm:$0x1]
        %v1481 = vld [vmem:[%s4] sm:$0x1]
        %1482 = vadd.xlane.f32.xlu0 %v1479
        %v1483 = vpop.xlane.xlu0 %1482
        %v1484 = vmul.f32 %v1483, %v534
        %v1485 = vsub.f32 %v1479, %v1484
        %v1486 = vmul.f32 %v1485, %v1485
        %1487 = vadd.xlane.f32.xlu0 %v1486
        %v1488 = vpop.xlane.xlu0 %1487
        %v1489 = vmul.f32 %v1488, %v534
        %v1490 = vadd.f32 %v1489, 1e-05
        %v1491 = vrsqrt.pop %v1490
        %v1492 = vmul.f32 %v1485, %v1491
        %v1494 = vlaneseq
        %v1495 = vshrl.u32 %v1494, 7
        %v1496 = vsub.s32 0, %v1495
        %v1497 = vrot.slane %v1480, %v1496
        %v1499 = vmul.f32 %v1492, %v1497
        %v1501 = vlaneseq
        %v1502 = vshrl.u32 %v1501, 7
        %v1503 = vsub.s32 0, %v1502
        %v1504 = vrot.slane %v1481, %v1503
        %v1506 = vadd.f32 %v1499, %v1504
        %v1507 = vpack.c.bf16 %v1506, %v1506
        %v1508 = vld [vmem:[#allocation10] sm:$0xff]
        %v1509 = vld [vmem:[#allocation10 + $0x8] sm:$0xff]
        %v1510 = vld [vmem:[#allocation10 + $0x20] sm:$0xff]
        %v1511 = vld [vmem:[#allocation10 + $0x28] sm:$0xff]
        %v1512 = vld [vmem:[#allocation10 + $0x40] sm:$0xff]
        %v1513 = vld [vmem:[#allocation10 + $0x48] sm:$0xff]
        %v1514 = vld [vmem:[#allocation10 + $0x60] sm:$0xff]
        %v1515 = vld [vmem:[#allocation10 + $0x68] sm:$0xff]
        %v1516 = vld [vmem:[#allocation10 + $0x80] sm:$0xff]
        %v1517 = vld [vmem:[#allocation10 + $0x88] sm:$0xff]
        %v1518 = vld [vmem:[#allocation10 + $0xa0] sm:$0xff]
        %v1519 = vld [vmem:[#allocation10 + $0xa8] sm:$0xff]
        %v1520 = vld [vmem:[#allocation10 + $0xc0] sm:$0xff]
        %v1521 = vld [vmem:[#allocation10 + $0xc8] sm:$0xff]
        %v1522 = vld [vmem:[#allocation10 + $0xe0] sm:$0xff]
        %v1523 = vld [vmem:[#allocation10 + $0xe8] sm:$0xff]
        %v1524 = vld [vmem:[#allocation10 + $0x100] sm:$0xff]
        %v1525 = vld [vmem:[#allocation10 + $0x108] sm:$0xff]
        %v1526 = vld [vmem:[#allocation10 + $0x120] sm:$0xff]
        %v1527 = vld [vmem:[#allocation10 + $0x128] sm:$0xff]
        %v1528 = vld [vmem:[#allocation10 + $0x140] sm:$0xff]
        %v1529 = vld [vmem:[#allocation10 + $0x148] sm:$0xff]
        %v1530 = vld [vmem:[#allocation10 + $0x160] sm:$0xff]
        %v1531 = vld [vmem:[#allocation10 + $0x168] sm:$0xff]
        %v1532 = vld [vmem:[#allocation10 + $0x180] sm:$0xff]
        %v1533 = vld [vmem:[#allocation10 + $0x188] sm:$0xff]
        %v1534 = vld [vmem:[#allocation10 + $0x1a0] sm:$0xff]
        %v1535 = vld [vmem:[#allocation10 + $0x1a8] sm:$0xff]
        %v1536 = vld [vmem:[#allocation10 + $0x1c0] sm:$0xff]
        %v1537 = vld [vmem:[#allocation10 + $0x1c8] sm:$0xff]
        %v1538 = vld [vmem:[#allocation10 + $0x1e0] sm:$0xff]
        %v1539 = vld [vmem:[#allocation10 + $0x1e8] sm:$0xff]
        %v1540 = vld [vmem:[%s10] sm:$0xf]
        %v1542 = vlaneseq
        %v1543 = vshrl.u32 %v1542, 7
        %v1544 = vsub.s32 0, %v1543
        %v1545 = vrot.slane %v1540, %v1544
        %v1546 = vlaneseq
        %v1547 = vshrl.u32 %v1546, 7
        %v1548 = vsub.s32 1, %v1547
        %v1549 = vrot.slane %v1540, %v1548
        %v1550 = vlaneseq
        %v1551 = vshrl.u32 %v1550, 7
        %v1552 = vsub.s32 2, %v1551
        %v1553 = vrot.slane %v1540, %v1552
        %v1554 = vlaneseq
        %v1555 = vshrl.u32 %v1554, 7
        %v1556 = vsub.s32 3, %v1555
        %v1557 = vrot.slane %v1540, %v1556
        %v1594 = vunpack.c.l.b16 %v1508
        %v1595 = vunpack.c.h.b16 %v1508
        %v1596 = vunpack.c.l.b16 %v1509
        %v1597 = vunpack.c.h.b16 %v1509
        %v1598 = vunpack.c.l.b16 %v1510
        %v1599 = vunpack.c.h.b16 %v1510
        %v1600 = vunpack.c.l.b16 %v1511
        %v1601 = vunpack.c.h.b16 %v1511
        %v1602 = vunpack.c.l.b16 %v1512
        %v1603 = vunpack.c.h.b16 %v1512
        %v1604 = vunpack.c.l.b16 %v1513
        %v1605 = vunpack.c.h.b16 %v1513
        %v1606 = vunpack.c.l.b16 %v1514
        %v1607 = vunpack.c.h.b16 %v1514
        %v1608 = vunpack.c.l.b16 %v1515
        %v1609 = vunpack.c.h.b16 %v1515
        %v1610 = vunpack.c.l.b16 %v1516
        %v1611 = vunpack.c.h.b16 %v1516
        %v1612 = vunpack.c.l.b16 %v1517
        %v1613 = vunpack.c.h.b16 %v1517
        %v1614 = vunpack.c.l.b16 %v1518
        %v1615 = vunpack.c.h.b16 %v1518
        %v1616 = vunpack.c.l.b16 %v1519
        %v1617 = vunpack.c.h.b16 %v1519
        %v1618 = vunpack.c.l.b16 %v1520
        %v1619 = vunpack.c.h.b16 %v1520
        %v1620 = vunpack.c.l.b16 %v1521
        %v1621 = vunpack.c.h.b16 %v1521
        %v1622 = vunpack.c.l.b16 %v1522
        %v1623 = vunpack.c.h.b16 %v1522
        %v1624 = vunpack.c.l.b16 %v1523
        %v1625 = vunpack.c.h.b16 %v1523
        %v1626 = vunpack.c.l.b16 %v1524
        %v1627 = vunpack.c.h.b16 %v1524
        %v1628 = vunpack.c.l.b16 %v1525
        %v1629 = vunpack.c.h.b16 %v1525
        %v1630 = vunpack.c.l.b16 %v1526
        %v1631 = vunpack.c.h.b16 %v1526
        %v1632 = vunpack.c.l.b16 %v1527
        %v1633 = vunpack.c.h.b16 %v1527
        %v1634 = vunpack.c.l.b16 %v1528
        %v1635 = vunpack.c.h.b16 %v1528
        %v1636 = vunpack.c.l.b16 %v1529
        %v1637 = vunpack.c.h.b16 %v1529
        %v1638 = vunpack.c.l.b16 %v1530
        %v1639 = vunpack.c.h.b16 %v1530
        %v1640 = vunpack.c.l.b16 %v1531
        %v1641 = vunpack.c.h.b16 %v1531
        %v1642 = vunpack.c.l.b16 %v1532
        %v1643 = vunpack.c.h.b16 %v1532
        %v1644 = vunpack.c.l.b16 %v1533
        %v1645 = vunpack.c.h.b16 %v1533
        %v1646 = vunpack.c.l.b16 %v1534
        %v1647 = vunpack.c.h.b16 %v1534
        %v1648 = vunpack.c.l.b16 %v1535
        %v1649 = vunpack.c.h.b16 %v1535
        %v1650 = vunpack.c.l.b16 %v1536
        %v1651 = vunpack.c.h.b16 %v1536
        %v1652 = vunpack.c.l.b16 %v1537
        %v1653 = vunpack.c.h.b16 %v1537
        %v1654 = vunpack.c.l.b16 %v1538
        %v1655 = vunpack.c.h.b16 %v1538
        %v1656 = vunpack.c.l.b16 %v1539
        %v1657 = vunpack.c.h.b16 %v1539
        %v1658 = vpack.c.b16 %v1598, %v1594
        %v1659 = vpack.c.b16 %v1599, %v1595
        %v1660 = vpack.c.b16 %v1600, %v1596
        %v1661 = vpack.c.b16 %v1601, %v1597
        %v1662 = vpack.c.b16 %v1606, %v1602
        %v1663 = vpack.c.b16 %v1607, %v1603
        %v1664 = vpack.c.b16 %v1608, %v1604
        %v1665 = vpack.c.b16 %v1609, %v1605
        %v1666 = vpack.c.b16 %v1614, %v1610
        %v1667 = vpack.c.b16 %v1615, %v1611
        %v1668 = vpack.c.b16 %v1616, %v1612
        %v1669 = vpack.c.b16 %v1617, %v1613
        %v1670 = vpack.c.b16 %v1622, %v1618
        %v1671 = vpack.c.b16 %v1623, %v1619
        %v1672 = vpack.c.b16 %v1624, %v1620
        %v1673 = vpack.c.b16 %v1625, %v1621
        %v1674 = vpack.c.b16 %v1630, %v1626
        %v1675 = vpack.c.b16 %v1631, %v1627
        %v1676 = vpack.c.b16 %v1632, %v1628
        %v1677 = vpack.c.b16 %v1633, %v1629
        %v1678 = vpack.c.b16 %v1638, %v1634
        %v1679 = vpack.c.b16 %v1639, %v1635
        %v1680 = vpack.c.b16 %v1640, %v1636
        %v1681 = vpack.c.b16 %v1641, %v1637
        %v1682 = vpack.c.b16 %v1646, %v1642
        %v1683 = vpack.c.b16 %v1647, %v1643
        %v1684 = vpack.c.b16 %v1648, %v1644
        %v1685 = vpack.c.b16 %v1649, %v1645
        %v1686 = vpack.c.b16 %v1654, %v1650
        %v1687 = vpack.c.b16 %v1655, %v1651
        %v1688 = vpack.c.b16 %v1656, %v1652
        %v1689 = vpack.c.b16 %v1657, %v1653
        %1722 = vmatprep.subr.bf16.mxu0 %v1687
        %1723 = vmatpush1.bf16.msra.mxu0 %v1686
        %1724 = vmatprep.subr.bf16.mxu0 %v1683
        %1725 = vmatpush1.bf16.msra.mxu0 %v1682
        %1726 = vmatprep.subr.bf16.mxu0 %v1679
        %1727 = vmatpush1.bf16.msra.mxu0 %v1678
        %1728 = vmatprep.subr.bf16.mxu0 %v1675
        %1729 = vmatpush1.bf16.msra.mxu0 %v1674
        %1730 = vmatprep.subr.bf16.mxu0 %v1671
        %1731 = vmatpush1.bf16.msra.mxu0 %v1670
        %1732 = vmatprep.subr.bf16.mxu0 %v1667
        %1733 = vmatpush1.bf16.msra.mxu0 %v1666
        %1734 = vmatprep.subr.bf16.mxu0 %v1663
        %1735 = vmatpush1.bf16.msra.mxu0 %v1662
        %1736 = vmatprep.subr.bf16.mxu0 %v1659
        %1737 = vmatpush1.bf16.msra.mxu0 %v1658
        %1738 = vmatprep.subr.bf16.mxu0 0
        %1739 = vmatpush2.bf16.msra.mxu0 0
        %1740 = vmatprep.subr.bf16.mxu0 0
        %1741 = vmatpush2.bf16.msra.mxu0 0
        %1742 = vmatprep.subr.bf16.mxu0 0
        %1743 = vmatpush2.bf16.msra.mxu0 0
        %1744 = vmatprep.subr.bf16.mxu0 0
        %1745 = vmatpush2.bf16.msra.mxu0 0
        %1746 = vmatprep.subr.bf16.mxu0 0
        %1747 = vmatpush2.bf16.msra.mxu0 0
        %1748 = vmatprep.subr.bf16.mxu0 0
        %1749 = vmatpush2.bf16.msra.mxu0 0
        %1750 = vmatprep.subr.bf16.mxu0 0
        %1751 = vmatpush2.bf16.msra.mxu0 0
        %1752 = vmatprep.subr.bf16.mxu0 0
        %1753 = vmatpush2.bf16.msra.mxu0 0
        %1754 = vmatprep.mubr.bf16.mxu0 0
        %1755 = vmatmul.mubr.bf16.gmra.mxu0 %v1507
        %v1756 = vpop.f32.mrf.mxu0
        %v1757 = vadd.f32 %v1545, %v1756
        %v1758 = vpop.f32.mrf.mxu0
        %v1759 = vadd.f32 %v1549, %v1758
        %v1760 = vpop.f32.mrf.mxu0
        %v1761 = vpop.f32.mrf.mxu0
        %1762 = vdwg.mxu0
        %1763 = vmatprep.subr.bf16.mxu0 %v1689
        %1764 = vmatpush1.bf16.msra.mxu0 %v1688
        %1765 = vmatprep.subr.bf16.mxu0 %v1685
        %1766 = vmatpush1.bf16.msra.mxu0 %v1684
        %1767 = vmatprep.subr.bf16.mxu0 %v1681
        %1768 = vmatpush1.bf16.msra.mxu0 %v1680
        %1769 = vmatprep.subr.bf16.mxu0 %v1677
        %1770 = vmatpush1.bf16.msra.mxu0 %v1676
        %1771 = vmatprep.subr.bf16.mxu0 %v1673
        %1772 = vmatpush1.bf16.msra.mxu0 %v1672
        %1773 = vmatprep.subr.bf16.mxu0 %v1669
        %1774 = vmatpush1.bf16.msra.mxu0 %v1668
        %1775 = vmatprep.subr.bf16.mxu0 %v1665
        %1776 = vmatpush1.bf16.msra.mxu0 %v1664
        %1777 = vmatprep.subr.bf16.mxu0 %v1661
        %1778 = vmatpush1.bf16.msra.mxu0 %v1660
        %1779 = vmatprep.subr.bf16.mxu0 0
        %1780 = vmatpush2.bf16.msra.mxu0 0
        %1781 = vmatprep.subr.bf16.mxu0 0
        %1782 = vmatpush2.bf16.msra.mxu0 0
        %1783 = vmatprep.subr.bf16.mxu0 0
        %1784 = vmatpush2.bf16.msra.mxu0 0
        %1785 = vmatprep.subr.bf16.mxu0 0
        %1786 = vmatpush2.bf16.msra.mxu0 0
        %1787 = vmatprep.subr.bf16.mxu0 0
        %1788 = vmatpush2.bf16.msra.mxu0 0
        %1789 = vmatprep.subr.bf16.mxu0 0
        %1790 = vmatpush2.bf16.msra.mxu0 0
        %1791 = vmatprep.subr.bf16.mxu0 0
        %1792 = vmatpush2.bf16.msra.mxu0 0
        %1793 = vmatprep.subr.bf16.mxu0 0
        %1794 = vmatpush2.bf16.msra.mxu0 0
        %1795 = vmatprep.mubr.bf16.mxu0 0
        %1796 = vmatmul.mubr.bf16.gmra.mxu0 %v1507
        %v1797 = vpop.f32.mrf.mxu0
        %v1798 = vadd.f32 %v1553, %v1797
        %v1799 = vpop.f32.mrf.mxu0
        %v1800 = vadd.f32 %v1557, %v1799
        %v1801 = vpop.f32.mrf.mxu0
        %v1802 = vpop.f32.mrf.mxu0
        %1803 = vdwg.mxu0
        %v1804 = vld [vmem:[#allocation10 + $0x10] sm:$0xff]
        %v1805 = vld [vmem:[#allocation10 + $0x18] sm:$0xff]
        %v1806 = vld [vmem:[#allocation10 + $0x30] sm:$0xff]
        %v1807 = vld [vmem:[#allocation10 + $0x38] sm:$0xff]
        %v1808 = vld [vmem:[#allocation10 + $0x50] sm:$0xff]
        %v1809 = vld [vmem:[#allocation10 + $0x58] sm:$0xff]
        %v1810 = vld [vmem:[#allocation10 + $0x70] sm:$0xff]
        %v1811 = vld [vmem:[#allocation10 + $0x78] sm:$0xff]
        %v1812 = vld [vmem:[#allocation10 + $0x90] sm:$0xff]
        %v1813 = vld [vmem:[#allocation10 + $0x98] sm:$0xff]
        %v1814 = vld [vmem:[#allocation10 + $0xb0] sm:$0xff]
        %v1815 = vld [vmem:[#allocation10 + $0xb8] sm:$0xff]
        %v1816 = vld [vmem:[#allocation10 + $0xd0] sm:$0xff]
        %v1817 = vld [vmem:[#allocation10 + $0xd8] sm:$0xff]
        %v1818 = vld [vmem:[#allocation10 + $0xf0] sm:$0xff]
        %v1819 = vld [vmem:[#allocation10 + $0xf8] sm:$0xff]
        %v1820 = vld [vmem:[#allocation10 + $0x110] sm:$0xff]
        %v1821 = vld [vmem:[#allocation10 + $0x118] sm:$0xff]
        %v1822 = vld [vmem:[#allocation10 + $0x130] sm:$0xff]
        %v1823 = vld [vmem:[#allocation10 + $0x138] sm:$0xff]
        %v1824 = vld [vmem:[#allocation10 + $0x150] sm:$0xff]
        %v1825 = vld [vmem:[#allocation10 + $0x158] sm:$0xff]
        %v1826 = vld [vmem:[#allocation10 + $0x170] sm:$0xff]
        %v1827 = vld [vmem:[#allocation10 + $0x178] sm:$0xff]
        %v1828 = vld [vmem:[#allocation10 + $0x190] sm:$0xff]
        %v1829 = vld [vmem:[#allocation10 + $0x198] sm:$0xff]
        %v1830 = vld [vmem:[#allocation10 + $0x1b0] sm:$0xff]
        %v1831 = vld [vmem:[#allocation10 + $0x1b8] sm:$0xff]
        %v1832 = vld [vmem:[#allocation10 + $0x1d0] sm:$0xff]
        %v1833 = vld [vmem:[#allocation10 + $0x1d8] sm:$0xff]
        %v1834 = vld [vmem:[#allocation10 + $0x1f0] sm:$0xff]
        %v1835 = vld [vmem:[#allocation10 + $0x1f8] sm:$0xff]
        %v1836 = vld [vmem:[%s10 + $0x4] sm:$0xf]
        %v1838 = vlaneseq
        %v1839 = vshrl.u32 %v1838, 7
        %v1840 = vsub.s32 0, %v1839
        %v1841 = vrot.slane %v1836, %v1840
        %v1842 = vlaneseq
        %v1843 = vshrl.u32 %v1842, 7
        %v1844 = vsub.s32 1, %v1843
        %v1845 = vrot.slane %v1836, %v1844
        %v1846 = vlaneseq
        %v1847 = vshrl.u32 %v1846, 7
        %v1848 = vsub.s32 2, %v1847
        %v1849 = vrot.slane %v1836, %v1848
        %v1850 = vlaneseq
        %v1851 = vshrl.u32 %v1850, 7
        %v1852 = vsub.s32 3, %v1851
        %v1853 = vrot.slane %v1836, %v1852
        %v1890 = vunpack.c.l.b16 %v1804
        %v1891 = vunpack.c.h.b16 %v1804
        %v1892 = vunpack.c.l.b16 %v1805
        %v1893 = vunpack.c.h.b16 %v1805
        %v1894 = vunpack.c.l.b16 %v1806
        %v1895 = vunpack.c.h.b16 %v1806
        %v1896 = vunpack.c.l.b16 %v1807
        %v1897 = vunpack.c.h.b16 %v1807
        %v1898 = vunpack.c.l.b16 %v1808
        %v1899 = vunpack.c.h.b16 %v1808
        %v1900 = vunpack.c.l.b16 %v1809
        %v1901 = vunpack.c.h.b16 %v1809
        %v1902 = vunpack.c.l.b16 %v1810
        %v1903 = vunpack.c.h.b16 %v1810
        %v1904 = vunpack.c.l.b16 %v1811
        %v1905 = vunpack.c.h.b16 %v1811
        %v1906 = vunpack.c.l.b16 %v1812
        %v1907 = vunpack.c.h.b16 %v1812
        %v1908 = vunpack.c.l.b16 %v1813
        %v1909 = vunpack.c.h.b16 %v1813
        %v1910 = vunpack.c.l.b16 %v1814
        %v1911 = vunpack.c.h.b16 %v1814
        %v1912 = vunpack.c.l.b16 %v1815
        %v1913 = vunpack.c.h.b16 %v1815
        %v1914 = vunpack.c.l.b16 %v1816
        %v1915 = vunpack.c.h.b16 %v1816
        %v1916 = vunpack.c.l.b16 %v1817
        %v1917 = vunpack.c.h.b16 %v1817
        %v1918 = vunpack.c.l.b16 %v1818
        %v1919 = vunpack.c.h.b16 %v1818
        %v1920 = vunpack.c.l.b16 %v1819
        %v1921 = vunpack.c.h.b16 %v1819
        %v1922 = vunpack.c.l.b16 %v1820
        %v1923 = vunpack.c.h.b16 %v1820
        %v1924 = vunpack.c.l.b16 %v1821
        %v1925 = vunpack.c.h.b16 %v1821
        %v1926 = vunpack.c.l.b16 %v1822
        %v1927 = vunpack.c.h.b16 %v1822
        %v1928 = vunpack.c.l.b16 %v1823
        %v1929 = vunpack.c.h.b16 %v1823
        %v1930 = vunpack.c.l.b16 %v1824
        %v1931 = vunpack.c.h.b16 %v1824
        %v1932 = vunpack.c.l.b16 %v1825
        %v1933 = vunpack.c.h.b16 %v1825
        %v1934 = vunpack.c.l.b16 %v1826
        %v1935 = vunpack.c.h.b16 %v1826
        %v1936 = vunpack.c.l.b16 %v1827
        %v1937 = vunpack.c.h.b16 %v1827
        %v1938 = vunpack.c.l.b16 %v1828
        %v1939 = vunpack.c.h.b16 %v1828
        %v1940 = vunpack.c.l.b16 %v1829
        %v1941 = vunpack.c.h.b16 %v1829
        %v1942 = vunpack.c.l.b16 %v1830
        %v1943 = vunpack.c.h.b16 %v1830
        %v1944 = vunpack.c.l.b16 %v1831
        %v1945 = vunpack.c.h.b16 %v1831
        %v1946 = vunpack.c.l.b16 %v1832
        %v1947 = vunpack.c.h.b16 %v1832
        %v1948 = vunpack.c.l.b16 %v1833
        %v1949 = vunpack.c.h.b16 %v1833
        %v1950 = vunpack.c.l.b16 %v1834
        %v1951 = vunpack.c.h.b16 %v1834
        %v1952 = vunpack.c.l.b16 %v1835
        %v1953 = vunpack.c.h.b16 %v1835
        %v1954 = vpack.c.b16 %v1894, %v1890
        %v1955 = vpack.c.b16 %v1895, %v1891
        %v1956 = vpack.c.b16 %v1896, %v1892
        %v1957 = vpack.c.b16 %v1897, %v1893
        %v1958 = vpack.c.b16 %v1902, %v1898
        %v1959 = vpack.c.b16 %v1903, %v1899
        %v1960 = vpack.c.b16 %v1904, %v1900
        %v1961 = vpack.c.b16 %v1905, %v1901
        %v1962 = vpack.c.b16 %v1910, %v1906
        %v1963 = vpack.c.b16 %v1911, %v1907
        %v1964 = vpack.c.b16 %v1912, %v1908
        %v1965 = vpack.c.b16 %v1913, %v1909
        %v1966 = vpack.c.b16 %v1918, %v1914
        %v1967 = vpack.c.b16 %v1919, %v1915
        %v1968 = vpack.c.b16 %v1920, %v1916
        %v1969 = vpack.c.b16 %v1921, %v1917
        %v1970 = vpack.c.b16 %v1926, %v1922
        %v1971 = vpack.c.b16 %v1927, %v1923
        %v1972 = vpack.c.b16 %v1928, %v1924
        %v1973 = vpack.c.b16 %v1929, %v1925
        %v1974 = vpack.c.b16 %v1934, %v1930
        %v1975 = vpack.c.b16 %v1935, %v1931
        %v1976 = vpack.c.b16 %v1936, %v1932
        %v1977 = vpack.c.b16 %v1937, %v1933
        %v1978 = vpack.c.b16 %v1942, %v1938
        %v1979 = vpack.c.b16 %v1943, %v1939
        %v1980 = vpack.c.b16 %v1944, %v1940
        %v1981 = vpack.c.b16 %v1945, %v1941
        %v1982 = vpack.c.b16 %v1950, %v1946
        %v1983 = vpack.c.b16 %v1951, %v1947
        %v1984 = vpack.c.b16 %v1952, %v1948
        %v1985 = vpack.c.b16 %v1953, %v1949
        %2018 = vmatprep.subr.bf16.mxu0 %v1983
        %2019 = vmatpush1.bf16.msra.mxu0 %v1982
        %2020 = vmatprep.subr.bf16.mxu0 %v1979
        %2021 = vmatpush1.bf16.msra.mxu0 %v1978
        %2022 = vmatprep.subr.bf16.mxu0 %v1975
        %2023 = vmatpush1.bf16.msra.mxu0 %v1974
        %2024 = vmatprep.subr.bf16.mxu0 %v1971
        %2025 = vmatpush1.bf16.msra.mxu0 %v1970
        %2026 = vmatprep.subr.bf16.mxu0 %v1967
        %2027 = vmatpush1.bf16.msra.mxu0 %v1966
        %2028 = vmatprep.subr.bf16.mxu0 %v1963
        %2029 = vmatpush1.bf16.msra.mxu0 %v1962
        %2030 = vmatprep.subr.bf16.mxu0 %v1959
        %2031 = vmatpush1.bf16.msra.mxu0 %v1958
        %2032 = vmatprep.subr.bf16.mxu0 %v1955
        %2033 = vmatpush1.bf16.msra.mxu0 %v1954
        %2034 = vmatprep.subr.bf16.mxu0 0
        %2035 = vmatpush2.bf16.msra.mxu0 0
        %2036 = vmatprep.subr.bf16.mxu0 0
        %2037 = vmatpush2.bf16.msra.mxu0 0
        %2038 = vmatprep.subr.bf16.mxu0 0
        %2039 = vmatpush2.bf16.msra.mxu0 0
        %2040 = vmatprep.subr.bf16.mxu0 0
        %2041 = vmatpush2.bf16.msra.mxu0 0
        %2042 = vmatprep.subr.bf16.mxu0 0
        %2043 = vmatpush2.bf16.msra.mxu0 0
        %2044 = vmatprep.subr.bf16.mxu0 0
        %2045 = vmatpush2.bf16.msra.mxu0 0
        %2046 = vmatprep.subr.bf16.mxu0 0
        %2047 = vmatpush2.bf16.msra.mxu0 0
        %2048 = vmatprep.subr.bf16.mxu0 0
        %2049 = vmatpush2.bf16.msra.mxu0 0
        %2050 = vmatprep.mubr.bf16.mxu0 0
        %2051 = vmatmul.mubr.bf16.gmra.mxu0 %v1507
        %v2052 = vpop.f32.mrf.mxu0
        %v2053 = vadd.f32 %v1841, %v2052
        %v2054 = vpop.f32.mrf.mxu0
        %v2055 = vadd.f32 %v1845, %v2054
        %v2056 = vpop.f32.mrf.mxu0
        %v2057 = vpop.f32.mrf.mxu0
        %2058 = vdwg.mxu0
        %2059 = vmatprep.subr.bf16.mxu0 %v1985
        %2060 = vmatpush1.bf16.msra.mxu0 %v1984
        %2061 = vmatprep.subr.bf16.mxu0 %v1981
        %2062 = vmatpush1.bf16.msra.mxu0 %v1980
        %2063 = vmatprep.subr.bf16.mxu0 %v1977
        %2064 = vmatpush1.bf16.msra.mxu0 %v1976
        %2065 = vmatprep.subr.bf16.mxu0 %v1973
        %2066 = vmatpush1.bf16.msra.mxu0 %v1972
        %2067 = vmatprep.subr.bf16.mxu0 %v1969
        %2068 = vmatpush1.bf16.msra.mxu0 %v1968
        %2069 = vmatprep.subr.bf16.mxu0 %v1965
        %2070 = vmatpush1.bf16.msra.mxu0 %v1964
        %2071 = vmatprep.subr.bf16.mxu0 %v1961
        %2072 = vmatpush1.bf16.msra.mxu0 %v1960
        %2073 = vmatprep.subr.bf16.mxu0 %v1957
        %2074 = vmatpush1.bf16.msra.mxu0 %v1956
        %2075 = vmatprep.subr.bf16.mxu0 0
        %2076 = vmatpush2.bf16.msra.mxu0 0
        %2077 = vmatprep.subr.bf16.mxu0 0
        %2078 = vmatpush2.bf16.msra.mxu0 0
        %2079 = vmatprep.subr.bf16.mxu0 0
        %2080 = vmatpush2.bf16.msra.mxu0 0
        %2081 = vmatprep.subr.bf16.mxu0 0
        %2082 = vmatpush2.bf16.msra.mxu0 0
        %2083 = vmatprep.subr.bf16.mxu0 0
        %2084 = vmatpush2.bf16.msra.mxu0 0
        %2085 = vmatprep.subr.bf16.mxu0 0
        %2086 = vmatpush2.bf16.msra.mxu0 0
        %2087 = vmatprep.subr.bf16.mxu0 0
        %2088 = vmatpush2.bf16.msra.mxu0 0
        %2089 = vmatprep.subr.bf16.mxu0 0
        %2090 = vmatpush2.bf16.msra.mxu0 0
        %2091 = vmatprep.mubr.bf16.mxu0 0
        %2092 = vmatmul.mubr.bf16.gmra.mxu0 %v1507
        %v2093 = vpop.f32.mrf.mxu0
        %v2094 = vadd.f32 %v1849, %v2093
        %v2095 = vpop.f32.mrf.mxu0
        %v2096 = vadd.f32 %v1853, %v2095
        %v2097 = vpop.f32.mrf.mxu0
        %v2098 = vpop.f32.mrf.mxu0
        %2099 = vdwg.mxu0
        %v2100 = vmul.f32 %v1757, 0.5
        %v2101 = vmul.f32 %v1759, 0.5
        %v2102 = vmul.f32 %v1798, 0.5
        %v2103 = vmul.f32 %v1800, 0.5
        %v2104 = vmul.f32 %v1757, 0.70710677
        %v2105 = vmul.f32 %v1759, 0.70710677
        %v2106 = vmul.f32 %v1798, 0.70710677
        %v2107 = vmul.f32 %v1800, 0.70710677
        %v2108 = verf.f32.pop %v2104
        %v2109 = verf.f32.pop %v2105
        %v2110 = verf.f32.pop %v2106
        %v2111 = verf.f32.pop %v2107
        %v2112 = vadd.f32 %v2108, 1.0
        %v2113 = vadd.f32 %v2109, 1.0
        %v2114 = vadd.f32 %v2110, 1.0
        %v2115 = vadd.f32 %v2111, 1.0
        %v2116 = vmul.f32 %v2100, %v2112
        %v2117 = vmul.f32 %v2101, %v2113
        %v2118 = vmul.f32 %v2102, %v2114
        %v2119 = vmul.f32 %v2103, %v2115
        %v2120 = vmul.f32 %v2116, %v2053
        %v2121 = vmul.f32 %v2117, %v2055
        %v2122 = vmul.f32 %v2118, %v2094
        %v2123 = vmul.f32 %v2119, %v2096
        %v2124 = vpack.c.bf16 %v2120, %v2120
        %v2125 = vpack.c.bf16 %v2121, %v2121
        %v2126 = vpack.c.bf16 %v2122, %v2122
        %v2127 = vpack.c.bf16 %v2123, %v2123
        %v2128 = vld [vmem:[#allocation11] sm:$0xf]
        %v2129 = vld [vmem:[#allocation11 + $0x4] sm:$0xf]
        %v2130 = vld [vmem:[#allocation11 + $0x8] sm:$0xf]
        %v2131 = vld [vmem:[#allocation11 + $0xc] sm:$0xf]
        %v2132 = vld [vmem:[#allocation11 + $0x10] sm:$0xf]
        %v2133 = vld [vmem:[#allocation11 + $0x14] sm:$0xf]
        %v2134 = vld [vmem:[#allocation11 + $0x18] sm:$0xf]
        %v2135 = vld [vmem:[#allocation11 + $0x1c] sm:$0xf]
        %v2136 = vld [vmem:[#allocation11 + $0x20] sm:$0xf]
        %v2137 = vld [vmem:[#allocation11 + $0x24] sm:$0xf]
        %v2138 = vld [vmem:[#allocation11 + $0x28] sm:$0xf]
        %v2139 = vld [vmem:[#allocation11 + $0x2c] sm:$0xf]
        %v2140 = vld [vmem:[#allocation11 + $0x30] sm:$0xf]
        %v2141 = vld [vmem:[#allocation11 + $0x34] sm:$0xf]
        %v2142 = vld [vmem:[#allocation11 + $0x38] sm:$0xf]
        %v2143 = vld [vmem:[#allocation11 + $0x3c] sm:$0xf]
        %v2144 = vld [vmem:[#allocation11 + $0x40] sm:$0xf]
        %v2145 = vld [vmem:[#allocation11 + $0x44] sm:$0xf]
        %v2146 = vld [vmem:[#allocation11 + $0x48] sm:$0xf]
        %v2147 = vld [vmem:[#allocation11 + $0x4c] sm:$0xf]
        %v2148 = vld [vmem:[#allocation11 + $0x50] sm:$0xf]
        %v2149 = vld [vmem:[#allocation11 + $0x54] sm:$0xf]
        %v2150 = vld [vmem:[#allocation11 + $0x58] sm:$0xf]
        %v2151 = vld [vmem:[#allocation11 + $0x5c] sm:$0xf]
        %v2152 = vld [vmem:[#allocation11 + $0x60] sm:$0xf]
        %v2153 = vld [vmem:[#allocation11 + $0x64] sm:$0xf]
        %v2154 = vld [vmem:[#allocation11 + $0x68] sm:$0xf]
        %v2155 = vld [vmem:[#allocation11 + $0x6c] sm:$0xf]
        %v2156 = vld [vmem:[#allocation11 + $0x70] sm:$0xf]
        %v2157 = vld [vmem:[#allocation11 + $0x74] sm:$0xf]
        %v2158 = vld [vmem:[#allocation11 + $0x78] sm:$0xf]
        %v2159 = vld [vmem:[#allocation11 + $0x7c] sm:$0xf]
        %v2160 = vld [vmem:[#allocation11 + $0x80] sm:$0xf]
        %v2161 = vld [vmem:[#allocation11 + $0x84] sm:$0xf]
        %v2162 = vld [vmem:[#allocation11 + $0x88] sm:$0xf]
        %v2163 = vld [vmem:[#allocation11 + $0x8c] sm:$0xf]
        %v2164 = vld [vmem:[#allocation11 + $0x90] sm:$0xf]
        %v2165 = vld [vmem:[#allocation11 + $0x94] sm:$0xf]
        %v2166 = vld [vmem:[#allocation11 + $0x98] sm:$0xf]
        %v2167 = vld [vmem:[#allocation11 + $0x9c] sm:$0xf]
        %v2168 = vld [vmem:[#allocation11 + $0xa0] sm:$0xf]
        %v2169 = vld [vmem:[#allocation11 + $0xa4] sm:$0xf]
        %v2170 = vld [vmem:[#allocation11 + $0xa8] sm:$0xf]
        %v2171 = vld [vmem:[#allocation11 + $0xac] sm:$0xf]
        %v2172 = vld [vmem:[#allocation11 + $0xb0] sm:$0xf]
        %v2173 = vld [vmem:[#allocation11 + $0xb4] sm:$0xf]
        %v2174 = vld [vmem:[#allocation11 + $0xb8] sm:$0xf]
        %v2175 = vld [vmem:[#allocation11 + $0xbc] sm:$0xf]
        %v2176 = vld [vmem:[#allocation11 + $0xc0] sm:$0xf]
        %v2177 = vld [vmem:[#allocation11 + $0xc4] sm:$0xf]
        %v2178 = vld [vmem:[#allocation11 + $0xc8] sm:$0xf]
        %v2179 = vld [vmem:[#allocation11 + $0xcc] sm:$0xf]
        %v2180 = vld [vmem:[#allocation11 + $0xd0] sm:$0xf]
        %v2181 = vld [vmem:[#allocation11 + $0xd4] sm:$0xf]
        %v2182 = vld [vmem:[#allocation11 + $0xd8] sm:$0xf]
        %v2183 = vld [vmem:[#allocation11 + $0xdc] sm:$0xf]
        %v2184 = vld [vmem:[#allocation11 + $0xe0] sm:$0xf]
        %v2185 = vld [vmem:[#allocation11 + $0xe4] sm:$0xf]
        %v2186 = vld [vmem:[#allocation11 + $0xe8] sm:$0xf]
        %v2187 = vld [vmem:[#allocation11 + $0xec] sm:$0xf]
        %v2188 = vld [vmem:[#allocation11 + $0xf0] sm:$0xf]
        %v2189 = vld [vmem:[#allocation11 + $0xf4] sm:$0xf]
        %v2190 = vld [vmem:[#allocation11 + $0xf8] sm:$0xf]
        %v2191 = vld [vmem:[#allocation11 + $0xfc] sm:$0xf]
        %v2192 = vld [vmem:[%s12] sm:$0x1]
        %v2194 = vlaneseq
        %v2195 = vshrl.u32 %v2194, 7
        %v2196 = vsub.s32 0, %v2195
        %v2197 = vrot.slane %v2192, %v2196
        %v2263 = vunpack.c.l.b16 %v2128
        %v2264 = vunpack.c.l.b16 %v2129
        %v2265 = vunpack.c.l.b16 %v2130
        %v2266 = vunpack.c.l.b16 %v2131
        %v2267 = vunpack.c.l.b16 %v2132
        %v2268 = vunpack.c.l.b16 %v2133
        %v2269 = vunpack.c.l.b16 %v2134
        %v2270 = vunpack.c.l.b16 %v2135
        %v2271 = vunpack.c.l.b16 %v2136
        %v2272 = vunpack.c.l.b16 %v2137
        %v2273 = vunpack.c.l.b16 %v2138
        %v2274 = vunpack.c.l.b16 %v2139
        %v2275 = vunpack.c.l.b16 %v2140
        %v2276 = vunpack.c.l.b16 %v2141
        %v2277 = vunpack.c.l.b16 %v2142
        %v2278 = vunpack.c.l.b16 %v2143
        %v2279 = vunpack.c.l.b16 %v2144
        %v2280 = vunpack.c.l.b16 %v2145
        %v2281 = vunpack.c.l.b16 %v2146
        %v2282 = vunpack.c.l.b16 %v2147
        %v2283 = vunpack.c.l.b16 %v2148
        %v2284 = vunpack.c.l.b16 %v2149
        %v2285 = vunpack.c.l.b16 %v2150
        %v2286 = vunpack.c.l.b16 %v2151
        %v2287 = vunpack.c.l.b16 %v2152
        %v2288 = vunpack.c.l.b16 %v2153
        %v2289 = vunpack.c.l.b16 %v2154
        %v2290 = vunpack.c.l.b16 %v2155
        %v2291 = vunpack.c.l.b16 %v2156
        %v2292 = vunpack.c.l.b16 %v2157
        %v2293 = vunpack.c.l.b16 %v2158
        %v2294 = vunpack.c.l.b16 %v2159
        %v2295 = vunpack.c.l.b16 %v2160
        %v2296 = vunpack.c.l.b16 %v2161
        %v2297 = vunpack.c.l.b16 %v2162
        %v2298 = vunpack.c.l.b16 %v2163
        %v2299 = vunpack.c.l.b16 %v2164
        %v2300 = vunpack.c.l.b16 %v2165
        %v2301 = vunpack.c.l.b16 %v2166
        %v2302 = vunpack.c.l.b16 %v2167
        %v2303 = vunpack.c.l.b16 %v2168
        %v2304 = vunpack.c.l.b16 %v2169
        %v2305 = vunpack.c.l.b16 %v2170
        %v2306 = vunpack.c.l.b16 %v2171
        %v2307 = vunpack.c.l.b16 %v2172
        %v2308 = vunpack.c.l.b16 %v2173
        %v2309 = vunpack.c.l.b16 %v2174
        %v2310 = vunpack.c.l.b16 %v2175
        %v2311 = vunpack.c.l.b16 %v2176
        %v2312 = vunpack.c.l.b16 %v2177
        %v2313 = vunpack.c.l.b16 %v2178
        %v2314 = vunpack.c.l.b16 %v2179
        %v2315 = vunpack.c.l.b16 %v2180
        %v2316 = vunpack.c.l.b16 %v2181
        %v2317 = vunpack.c.l.b16 %v2182
        %v2318 = vunpack.c.l.b16 %v2183
        %v2319 = vunpack.c.l.b16 %v2184
        %v2320 = vunpack.c.l.b16 %v2185
        %v2321 = vunpack.c.l.b16 %v2186
        %v2322 = vunpack.c.l.b16 %v2187
        %v2323 = vunpack.c.l.b16 %v2188
        %v2324 = vunpack.c.l.b16 %v2189
        %v2325 = vunpack.c.l.b16 %v2190
        %v2326 = vunpack.c.l.b16 %v2191
        %v2327 = vpack.c.b16 %v2264, %v2263
        %v2328 = vpack.c.b16 %v2266, %v2265
        %v2329 = vpack.c.b16 %v2268, %v2267
        %v2330 = vpack.c.b16 %v2270, %v2269
        %v2331 = vpack.c.b16 %v2272, %v2271
        %v2332 = vpack.c.b16 %v2274, %v2273
        %v2333 = vpack.c.b16 %v2276, %v2275
        %v2334 = vpack.c.b16 %v2278, %v2277
        %v2335 = vpack.c.b16 %v2280, %v2279
        %v2336 = vpack.c.b16 %v2282, %v2281
        %v2337 = vpack.c.b16 %v2284, %v2283
        %v2338 = vpack.c.b16 %v2286, %v2285
        %v2339 = vpack.c.b16 %v2288, %v2287
        %v2340 = vpack.c.b16 %v2290, %v2289
        %v2341 = vpack.c.b16 %v2292, %v2291
        %v2342 = vpack.c.b16 %v2294, %v2293
        %v2343 = vpack.c.b16 %v2296, %v2295
        %v2344 = vpack.c.b16 %v2298, %v2297
        %v2345 = vpack.c.b16 %v2300, %v2299
        %v2346 = vpack.c.b16 %v2302, %v2301
        %v2347 = vpack.c.b16 %v2304, %v2303
        %v2348 = vpack.c.b16 %v2306, %v2305
        %v2349 = vpack.c.b16 %v2308, %v2307
        %v2350 = vpack.c.b16 %v2310, %v2309
        %v2351 = vpack.c.b16 %v2312, %v2311
        %v2352 = vpack.c.b16 %v2314, %v2313
        %v2353 = vpack.c.b16 %v2316, %v2315
        %v2354 = vpack.c.b16 %v2318, %v2317
        %v2355 = vpack.c.b16 %v2320, %v2319
        %v2356 = vpack.c.b16 %v2322, %v2321
        %v2357 = vpack.c.b16 %v2324, %v2323
        %v2358 = vpack.c.b16 %v2326, %v2325
        %2391 = vmatprep.subr.bf16.mxu0 0
        %2392 = vmatpush1.bf16.msra.mxu0 %v2334
        %2393 = vmatprep.subr.bf16.mxu0 0
        %2394 = vmatpush1.bf16.msra.mxu0 %v2333
        %2395 = vmatprep.subr.bf16.mxu0 0
        %2396 = vmatpush1.bf16.msra.mxu0 %v2332
        %2397 = vmatprep.subr.bf16.mxu0 0
        %2398 = vmatpush1.bf16.msra.mxu0 %v2331
        %2399 = vmatprep.subr.bf16.mxu0 0
        %2400 = vmatpush1.bf16.msra.mxu0 %v2330
        %2401 = vmatprep.subr.bf16.mxu0 0
        %2402 = vmatpush1.bf16.msra.mxu0 %v2329
        %2403 = vmatprep.subr.bf16.mxu0 0
        %2404 = vmatpush1.bf16.msra.mxu0 %v2328
        %2405 = vmatprep.subr.bf16.mxu0 0
        %2406 = vmatpush1.bf16.msra.mxu0 %v2327
        %2407 = vmatprep.subr.bf16.mxu0 0
        %2408 = vmatpush2.bf16.msra.mxu0 %v2342
        %2409 = vmatprep.subr.bf16.mxu0 0
        %2410 = vmatpush2.bf16.msra.mxu0 %v2341
        %2411 = vmatprep.subr.bf16.mxu0 0
        %2412 = vmatpush2.bf16.msra.mxu0 %v2340
        %2413 = vmatprep.subr.bf16.mxu0 0
        %2414 = vmatpush2.bf16.msra.mxu0 %v2339
        %2415 = vmatprep.subr.bf16.mxu0 0
        %2416 = vmatpush2.bf16.msra.mxu0 %v2338
        %2417 = vmatprep.subr.bf16.mxu0 0
        %2418 = vmatpush2.bf16.msra.mxu0 %v2337
        %2419 = vmatprep.subr.bf16.mxu0 0
        %2420 = vmatpush2.bf16.msra.mxu0 %v2336
        %2421 = vmatprep.subr.bf16.mxu0 0
        %2422 = vmatpush2.bf16.msra.mxu0 %v2335
        %2423 = vmatprep.mubr.bf16.mxu0 %v2125
        %2424 = vmatmul.mubr.bf16.gmra.mxu0 %v2124
        %v2425 = vpop.f32.mrf.mxu0
        %v2426 = vadd.f32 %v2197, %v2425
        %v2427 = vpop.f32.mrf.mxu0
        %v2428 = vpop.f32.mrf.mxu0
        %v2429 = vpop.f32.mrf.mxu0
        %2430 = vdwg.mxu0
        %2431 = vmatprep.subr.bf16.mxu0 0
        %2432 = vmatpush1.bf16.msra.mxu0 %v2350
        %2433 = vmatprep.subr.bf16.mxu0 0
        %2434 = vmatpush1.bf16.msra.mxu0 %v2349
        %2435 = vmatprep.subr.bf16.mxu0 0
        %2436 = vmatpush1.bf16.msra.mxu0 %v2348
        %2437 = vmatprep.subr.bf16.mxu0 0
        %2438 = vmatpush1.bf16.msra.mxu0 %v2347
        %2439 = vmatprep.subr.bf16.mxu0 0
        %2440 = vmatpush1.bf16.msra.mxu0 %v2346
        %2441 = vmatprep.subr.bf16.mxu0 0
        %2442 = vmatpush1.bf16.msra.mxu0 %v2345
        %2443 = vmatprep.subr.bf16.mxu0 0
        %2444 = vmatpush1.bf16.msra.mxu0 %v2344
        %2445 = vmatprep.subr.bf16.mxu0 0
        %2446 = vmatpush1.bf16.msra.mxu0 %v2343
        %2447 = vmatprep.subr.bf16.mxu0 0
        %2448 = vmatpush2.bf16.msra.mxu0 %v2358
        %2449 = vmatprep.subr.bf16.mxu0 0
        %2450 = vmatpush2.bf16.msra.mxu0 %v2357
        %2451 = vmatprep.subr.bf16.mxu0 0
        %2452 = vmatpush2.bf16.msra.mxu0 %v2356
        %2453 = vmatprep.subr.bf16.mxu0 0
        %2454 = vmatpush2.bf16.msra.mxu0 %v2355
        %2455 = vmatprep.subr.bf16.mxu0 0
        %2456 = vmatpush2.bf16.msra.mxu0 %v2354
        %2457 = vmatprep.subr.bf16.mxu0 0
        %2458 = vmatpush2.bf16.msra.mxu0 %v2353
        %2459 = vmatprep.subr.bf16.mxu0 0
        %2460 = vmatpush2.bf16.msra.mxu0 %v2352
        %2461 = vmatprep.subr.bf16.mxu0 0
        %2462 = vmatpush2.bf16.msra.mxu0 %v2351
        %2463 = vmatprep.mubr.bf16.mxu0 %v2127
        %2464 = vmatmul.mubr.bf16.gmra.mxu0 %v2126
        %v2465 = vpop.f32.mrf.mxu0
        %v2466 = vadd.f32 %v2426, %v2465
        %v2467 = vpop.f32.mrf.mxu0
        %v2468 = vpop.f32.mrf.mxu0
        %v2469 = vpop.f32.mrf.mxu0
        %2470 = vdwg.mxu0
        %v2471 = vadd.f32 %v1479, %v2466
        %v2472 = vpack.c.bf16 %v2471, %v2471
        %2473 = vst [vmem:[%s526] sm:$0xf] %v2472
        %s2474 = sand.u32 %s319, 1
        %s2475 = scalar_lea.sflag [#allocation4], %s2474
        %s2476 = sand.u32 %s319, 1
        %s2477 = smul.addr %s2476, 4
        %s2478 = scalar_lea.vmem [#allocation13], %s2477
        // Predicated region
        $region97: #{tpu_custom_call.1} parent=71 // pred_check
          %p2479 = pneg %p329
        $region98: #{tpu_custom_call.1} parent=71 // pred_check_branch
          %2481 = sbr.rel (%p2479) target = $region100
        $region99: #{tpu_custom_call.1} parent=71 // pred_region
          %s2483 = ssub.s32 64, 64
          %2484 = vsyncadd %s2475, %s2483
          %s2485 = smul.addr %s33, 64
          %s2486 = scalar_lea.hbm %s13, %s2485
          %s2488 = sshll.u32 %s2478, 4
          %s2489 = int_to_ptr.vmem [resolvable:$true] %s2488
          %2491 = dma.vmem_to_hbm [thread:$0]  %s2489, 64, %s2486, %s2475
        $region100: #{tpu_custom_call.1} parent=71 // pred_fallthru
          _
      $region72: #{tpu_custom_call.1} parent=5 // pred_fallthru
        _
      %p2492 = scmp.le.s32.totalorder 2, %s28
      // Predicated region
      $region101: #{tpu_custom_call.1} parent=5 // pred_check
        %p2493 = pneg %p2492
      $region102: #{tpu_custom_call.1} parent=5 // pred_check_branch
        %2495 = sbr.rel (%p2493) target = $region104
      $region103: #{tpu_custom_call.1} parent=5 // pred_region
        %s2496 = ssub.s32 %s28, 2
        // Predicated region
        $region105: #{tpu_custom_call.1} parent=103 // pred_check
          %p2497 = pneg %p335
        $region106: #{tpu_custom_call.1} parent=103 // pred_check_branch
          %2499 = sbr.rel (%p2497) target = $region108
        $region107: #{tpu_custom_call.1} parent=103 // pred_region
          %s2500 = sand.u32 %s320, 1
          %s2501 = scalar_lea.sflag [#allocation4], %s2500
          %s2502 = sand.u32 %s320, 1
          %s2503 = smul.addr %s2502, 4
          %s2504 = scalar_lea.vmem [#allocation13], %s2503
          %2505 = dma.done %s2501, 64
        $region108: #{tpu_custom_call.1} parent=103 // pred_fallthru
          _
      $region104: #{tpu_custom_call.1} parent=5 // pred_fallthru
        _
    $region6: #{tpu_custom_call.1} parent=1 // loop_footer
      %s32 = sadd.s32 1, %s28
    $region7: #{tpu_custom_call.1} parent=1 // loop_footer_branch
      %27 = sbr.rel target = $region3
    $region8: #{tpu_custom_call.1} parent=1 // loop_exit
      _
    %2506 = vsyncpa [#allocation3], 1
    %s2507 = scalar_lea.sflag [#allocation3], 1
    %2508 = vsyncpa %s2507, 1
    %2509 = vsyncpa [#allocation6], 1
    %2510 = vsyncpa [#allocation9], 1
    %2511 = vsyncpa [#allocation12], 1
    %2512 = vsyncpa [#allocation4], 1
    %s2513 = scalar_lea.sflag [#allocation4], 1
    %2514 = vsyncpa %s2513, 1

</llo_original>
